<compile_context>
chip_gen: v6e
topology: v6e:2x2x1
jax: 0.10.0
libtpu: 0.0.40
codegen_flags: <defaults>
</compile_context>

<pallas_src>
import functools

import jax
import jax.numpy as jnp
from jax.experimental import pallas as pl
from jax.experimental.pallas import tpu as pltpu


def _mhea_kernel(q_ref, e_ref, v_ref,
                 wv_ref, bv_ref, w1_ref, b1_ref, w2_ref, b2_ref,
                 val_out_ref, ef_out_ref):
    """One row-tile of the fused proj_value + nn_edge MLP stack.

    q_ref, e_ref, v_ref : (tile_n, dim_node/edge/node)   raw f32 inputs
    val_out_ref         : (tile_n, dim_atten)            projected value
    ef_out_ref          : (tile_n, dim_edge)             edge feature
    """
    cdt = wv_ref.dtype  # bf16 matmul operand dtype; accumulate/bias/ReLU in f32.

    q = q_ref[...].astype(cdt)
    e = e_ref[...].astype(cdt)
    v_in = v_ref[...].astype(cdt)

    # proj_value: Linear + ReLU.
    v = jnp.dot(v_in, wv_ref[...], preferred_element_type=jnp.float32)
    v = jnp.maximum(v + bv_ref[...], 0.0)
    val_out_ref[...] = v.astype(val_out_ref.dtype)

    # nn_edge layer 1: single K = 2*dim_node + dim_edge matmul on the in-VMEM
    # concat (one well-filled MXU push instead of several K=32 partial dots).
    cat = jnp.concatenate([q, e, v.astype(cdt)], axis=-1)
    h = jnp.dot(cat, w1_ref[...], preferred_element_type=jnp.float32)
    h = jnp.maximum(h + b1_ref[...], 0.0)

    # nn_edge layer 2 + final ReLU.
    ef = jnp.dot(h.astype(cdt), w2_ref[...], preferred_element_type=jnp.float32)
    ef = jnp.maximum(ef + b2_ref[...], 0.0)
    ef_out_ref[...] = ef.astype(ef_out_ref.dtype)


@functools.partial(jax.jit, static_argnames=("tile_n",))
def mhea_forward(query, edge, value, params, *, tile_n=4096):
    """params: kernel-ready dict from prepare_params() (bf16 weights (in,out),
    f32 (1, out) biases). Returns (value, edge_feature), both f32."""
    N, dim_node = query.shape
    dim_edge = edge.shape[1]
    wv, bv, w1, b1, w2, b2 = (params[k] for k in ("wv", "bv", "w1", "b1",
                                                  "w2", "b2"))
    dim_atten = wv.shape[1]
    d_in1 = w1.shape[0]        # 2*dim_node + dim_edge
    d_hidden = w1.shape[1]     # dim_node + dim_edge

    # Tile selection: big row tiles amortize the ~0.35 us per-grid-step
    # overhead.  Keep >= 2 grid steps when N allows so the "parallel" row axis
    # can be sharded across both v7x TensorCores.  tile_n=4096 keeps total VMEM
    # (double-buffered I/O blocks + intermediates) around ~9 MiB, under v5e's
    # 16 MiB default scoped limit; raise vmem_limit_bytes if you go larger.
    if N <= 16:
        tn = N
    else:
        half = ((pl.cdiv(N, 2) + 7) // 8) * 8   # round up to sublane multiple
        tn = min(tile_n, half)
    grid = (pl.cdiv(N, tn),)

    def row(i):
        return (i, 0)

    def full(i):
        return (0, 0)

    in_specs = [
        pl.BlockSpec((tn, dim_node), row),           # query
        pl.BlockSpec((tn, dim_edge), row),           # edge
        pl.BlockSpec((tn, dim_node), row),           # value (input)
        pl.BlockSpec((dim_node, dim_atten), full),   # wv   (VMEM-resident)
        pl.BlockSpec((1, dim_atten), full),          # bv
        pl.BlockSpec((d_in1, d_hidden), full),       # w1
        pl.BlockSpec((1, d_hidden), full),           # b1
        pl.BlockSpec((d_hidden, dim_edge), full),    # w2
        pl.BlockSpec((1, dim_edge), full),           # b2
    ]
    out_specs = [
        pl.BlockSpec((tn, dim_atten), row),          # projected value
        pl.BlockSpec((tn, dim_edge), row),           # edge_feature
    ]
    # Outputs kept f32 to match the PyTorch module's dtype contract.
    # TODO(synk): emit bf16 outputs here if downstream consumers tolerate it
    # (saves ~25-30% of HBM traffic on this mem-bound op).
    out_shape = (
        jax.ShapeDtypeStruct((N, dim_atten), query.dtype),
        jax.ShapeDtypeStruct((N, dim_edge), query.dtype),
    )

    in_itemsize = jnp.dtype(query.dtype).itemsize
    w_itemsize = jnp.dtype(wv.dtype).itemsize
    flops = 2 * N * (dim_node * dim_atten + d_in1 * d_hidden
                     + d_hidden * dim_edge)
    bytes_accessed = (
        N * (2 * dim_node + dim_edge) * in_itemsize        # q, e, v in
        + N * (dim_atten + dim_edge) * in_itemsize         # two outputs
        + (wv.size + w1.size + w2.size) * w_itemsize       # bf16 weights
        + (bv.size + b1.size + b2.size) * 4)               # f32 biases

    val_out, ef_out = pl.pallas_call(
        _mhea_kernel,
        out_shape=out_shape,
        grid_spec=pltpu.PrefetchScalarGridSpec(
            num_scalar_prefetch=0,
            grid=grid,
            in_specs=in_specs,
            out_specs=out_specs,
        ),
        compiler_params=pltpu.CompilerParams(
            dimension_semantics=("parallel",)),
        cost_estimate=pl.CostEstimate(
            flops=flops, transcendentals=0, bytes_accessed=bytes_accessed),
    )(query, edge, value, wv, bv, w1, b1, w2, b2)

    return val_out, ef_out


def init_params(key, dim_node, dim_edge, dim_atten):
    """Deterministic synthetic f32 parameters. Weights stored as (in, out)."""
    d_in1 = dim_node * 2 + dim_edge
    d_hid = dim_node + dim_edge
    ks = jax.random.split(key, 6)
    scale = 0.1
    return dict(
        wv=scale * jax.random.normal(ks[0], (dim_node, dim_atten), jnp.float32),
        bv=scale * jax.random.normal(ks[1], (1, dim_atten), jnp.float32),
        w1=scale * jax.random.normal(ks[2], (d_in1, d_hid), jnp.float32),
        b1=scale * jax.random.normal(ks[3], (1, d_hid), jnp.float32),
        w2=scale * jax.random.normal(ks[4], (d_hid, dim_edge), jnp.float32),
        b2=scale * jax.random.normal(ks[5], (1, dim_edge), jnp.float32),
    )


def prepare_params(params, compute_dtype=jnp.bfloat16):
    """One-time cast of weights to the matmul operand dtype (outside the hot
    path) and biases to f32 row vectors, as expected by mhea_forward."""
    return dict(
        wv=params["wv"].astype(compute_dtype),
        bv=params["bv"].astype(jnp.float32).reshape(1, -1),
        w1=params["w1"].astype(compute_dtype),
        b1=params["b1"].astype(jnp.float32).reshape(1, -1),
        w2=params["w2"].astype(compute_dtype),
        b2=params["b2"].astype(jnp.float32).reshape(1, -1),
    )


def reference_forward(query, edge, value, params, compute_dtype=None):
    """Pure-JAX reference. With compute_dtype set (e.g. bf16) it mirrors the
    kernel's mixed-precision pattern: cast matmul operands, accumulate in f32,
    bias/ReLU in f32. With compute_dtype=None it is the full-f32 PyTorch math."""
    def dot(x, w):
        if compute_dtype is not None:
            x, w = x.astype(compute_dtype), w.astype(compute_dtype)
        return jnp.dot(x, w, preferred_element_type=jnp.float32)

    v = jnp.maximum(dot(value, params["wv"]) + params["bv"], 0.0)
    cat = jnp.concatenate([query, edge, v], axis=1)
    h = jnp.maximum(dot(cat, params["w1"]) + params["b1"], 0.0)
    ef = jnp.maximum(dot(h, params["w2"]) + params["b2"], 0.0)
    return v, ef


if __name__ == "__main__":
    dim_node, dim_edge, dim_atten = 32, 32, 32   # module requires dim_atten == dim_node
    N = 512                                       # number of edges (rows)

    key = jax.random.PRNGKey(0)
    k_q, k_e, k_v, k_p = jax.random.split(key, 4)
    query = jax.random.normal(k_q, (N, dim_node), jnp.float32)
    edge = jax.random.normal(k_e, (N, dim_edge), jnp.float32)
    value = jax.random.normal(k_v, (N, dim_node), jnp.float32)

    params = init_params(k_p, dim_node, dim_edge, dim_atten)
    kparams = prepare_params(params)   # one-time bf16 weight cast

    # With N=512 the tile clamp picks 256-row tiles -> a 2-step "parallel"
    # grid, so both v7x TensorCores get work even at this demo size.
    val_out, edge_out = mhea_forward(query, edge, value, kparams)
    jax.block_until_ready((val_out, edge_out))

    # Strict check against a reference following the same mixed-precision path.
    val_ref, edge_ref = reference_forward(query, edge, value, params,
                                          compute_dtype=jnp.bfloat16)
    assert jnp.allclose(val_out, val_ref, atol=1e-3, rtol=1e-3)
    assert jnp.allclose(edge_out, edge_ref, atol=1e-3, rtol=1e-3)

    # Loose check against the full-f32 PyTorch-equivalent reference
    # (bf16 matmul operands introduce ~1e-2 absolute error at these scales).
    val_f32, edge_f32 = reference_forward(query, edge, value, params)
    assert jnp.allclose(val_out, val_f32, atol=5e-2, rtol=5e-2)
    assert jnp.allclose(edge_out, edge_f32, atol=5e-2, rtol=5e-2)

    print("KERNEL_OK")
</pallas_src>

<mosaic_0001>
module attributes {stable_mosaic.version = 11 : i64} {
  func.func @_mhea_kernel(%arg0: i32, %arg1: memref<256x32xf32, #tpu.memory_space<vmem>>, %arg2: memref<256x32xf32, #tpu.memory_space<vmem>>, %arg3: memref<256x32xf32, #tpu.memory_space<vmem>>, %arg4: memref<32x32xbf16, #tpu.memory_space<vmem>>, %arg5: memref<1x32xf32, #tpu.memory_space<vmem>>, %arg6: memref<96x64xbf16, #tpu.memory_space<vmem>>, %arg7: memref<1x64xf32, #tpu.memory_space<vmem>>, %arg8: memref<64x32xbf16, #tpu.memory_space<vmem>>, %arg9: memref<1x32xf32, #tpu.memory_space<vmem>>, %arg10: memref<256x32xf32, #tpu.memory_space<vmem>>, %arg11: memref<256x32xf32, #tpu.memory_space<vmem>>) attributes {dimension_semantics = [#tpu.dimension_semantics<parallel>], iteration_bounds = array<i64: 2>, scalar_prefetch = 0 : i64, scratch_operands = 0 : i64, tpu.core_type = #tpu.core_type<tc>, window_params = [{transform_indices = @transform_0, window_bounds = array<i64: 256, 32>}, {transform_indices = @transform_1, window_bounds = array<i64: 256, 32>}, {transform_indices = @transform_2, window_bounds = array<i64: 256, 32>}, {pipeline_mode = #tpu.pipeline_mode<synchronous>, transform_indices = @transform_3, window_bounds = array<i64: 32, 32>}, {pipeline_mode = #tpu.pipeline_mode<synchronous>, transform_indices = @transform_4, window_bounds = array<i64: 1, 32>}, {pipeline_mode = #tpu.pipeline_mode<synchronous>, transform_indices = @transform_5, window_bounds = array<i64: 96, 64>}, {pipeline_mode = #tpu.pipeline_mode<synchronous>, transform_indices = @transform_6, window_bounds = array<i64: 1, 64>}, {pipeline_mode = #tpu.pipeline_mode<synchronous>, transform_indices = @transform_7, window_bounds = array<i64: 64, 32>}, {pipeline_mode = #tpu.pipeline_mode<synchronous>, transform_indices = @transform_8, window_bounds = array<i64: 1, 32>}, {transform_indices = @transform_9, window_bounds = array<i64: 256, 32>}, {transform_indices = @transform_10, window_bounds = array<i64: 256, 32>}]} {
    %c0 = arith.constant 0 : index
    %c0_0 = arith.constant 0 : index
    %0 = vector.load %arg1[%c0, %c0_0] : memref<256x32xf32, #tpu.memory_space<vmem>>, vector<256x32xf32>
    %1 = arith.truncf %0 : vector<256x32xf32> to vector<256x32xbf16>
    %c0_1 = arith.constant 0 : index
    %c0_2 = arith.constant 0 : index
    %2 = vector.load %arg2[%c0_1, %c0_2] : memref<256x32xf32, #tpu.memory_space<vmem>>, vector<256x32xf32>
    %3 = arith.truncf %2 : vector<256x32xf32> to vector<256x32xbf16>
    %c0_3 = arith.constant 0 : index
    %c0_4 = arith.constant 0 : index
    %4 = vector.load %arg3[%c0_3, %c0_4] : memref<256x32xf32, #tpu.memory_space<vmem>>, vector<256x32xf32>
    %5 = arith.truncf %4 : vector<256x32xf32> to vector<256x32xbf16>
    %c0_5 = arith.constant 0 : index
    %c0_6 = arith.constant 0 : index
    %6 = vector.load %arg4[%c0_5, %c0_6] : memref<32x32xbf16, #tpu.memory_space<vmem>>, vector<32x32xbf16>
    %cst = arith.constant dense<0.000000e+00> : vector<256x32xf32>
    %7 = tpu.matmul %5, %6, %cst {dimension_numbers = #tpu.dot_dimension_numbers<[1], [0], [0], [1], [0, 0, 1, 1], [], []>} : vector<256x32xbf16>, vector<32x32xbf16>, vector<256x32xf32> -> vector<256x32xf32>
    %c0_7 = arith.constant 0 : index
    %c0_8 = arith.constant 0 : index
    %8 = vector.load %arg5[%c0_7, %c0_8] : memref<1x32xf32, #tpu.memory_space<vmem>>, vector<1x32xf32>
    %9 = vector.broadcast %8 : vector<1x32xf32> to vector<256x32xf32>
    %10 = arith.addf %7, %9 : vector<256x32xf32>
    %cst_9 = arith.constant 0.000000e+00 : f32
    %11 = vector.broadcast %cst_9 : f32 to vector<256x32xf32>
    %12 = arith.maximumf %10, %11 : vector<256x32xf32>
    %c0_10 = arith.constant 0 : index
    %c0_11 = arith.constant 0 : index
    %13 = vector.load %arg10[%c0_10, %c0_11] : memref<256x32xf32, #tpu.memory_space<vmem>>, vector<256x32xf32>
    tpu.vector_store %arg10[%c0_10, %c0_11], %12 {strides = array<i32>} : memref<256x32xf32, #tpu.memory_space<vmem>>, vector<256x32xf32>,
    %14 = arith.truncf %12 : vector<256x32xf32> to vector<256x32xbf16>
    %15 = tpu.concatenate %1, %3, %14 in 1 : vector<256x32xbf16>, vector<256x32xbf16>, vector<256x32xbf16> -> vector<256x96xbf16>
    %c0_12 = arith.constant 0 : index
    %c0_13 = arith.constant 0 : index
    %16 = vector.load %arg6[%c0_12, %c0_13] : memref<96x64xbf16, #tpu.memory_space<vmem>>, vector<96x64xbf16>
    %cst_14 = arith.constant dense<0.000000e+00> : vector<256x64xf32>
    %17 = tpu.matmul %15, %16, %cst_14 {dimension_numbers = #tpu.dot_dimension_numbers<[1], [0], [0], [1], [0, 0, 1, 1], [], []>} : vector<256x96xbf16>, vector<96x64xbf16>, vector<256x64xf32> -> vector<256x64xf32>
    %c0_15 = arith.constant 0 : index
    %c0_16 = arith.constant 0 : index
    %18 = vector.load %arg7[%c0_15, %c0_16] : memref<1x64xf32, #tpu.memory_space<vmem>>, vector<1x64xf32>
    %19 = vector.broadcast %18 : vector<1x64xf32> to vector<256x64xf32>
    %20 = arith.addf %17, %19 : vector<256x64xf32>
    %cst_17 = arith.constant 0.000000e+00 : f32
    %21 = vector.broadcast %cst_17 : f32 to vector<256x64xf32>
    %22 = arith.maximumf %20, %21 : vector<256x64xf32>
    %23 = arith.truncf %22 : vector<256x64xf32> to vector<256x64xbf16>
    %c0_18 = arith.constant 0 : index
    %c0_19 = arith.constant 0 : index
    %24 = vector.load %arg8[%c0_18, %c0_19] : memref<64x32xbf16, #tpu.memory_space<vmem>>, vector<64x32xbf16>
    %cst_20 = arith.constant dense<0.000000e+00> : vector<256x32xf32>
    %25 = tpu.matmul %23, %24, %cst_20 {dimension_numbers = #tpu.dot_dimension_numbers<[1], [0], [0], [1], [0, 0, 1, 1], [], []>} : vector<256x64xbf16>, vector<64x32xbf16>, vector<256x32xf32> -> vector<256x32xf32>
    %c0_21 = arith.constant 0 : index
    %c0_22 = arith.constant 0 : index
    %26 = vector.load %arg9[%c0_21, %c0_22] : memref<1x32xf32, #tpu.memory_space<vmem>>, vector<1x32xf32>
    %27 = vector.broadcast %26 : vector<1x32xf32> to vector<256x32xf32>
    %28 = arith.addf %25, %27 : vector<256x32xf32>
    %cst_23 = arith.constant 0.000000e+00 : f32
    %29 = vector.broadcast %cst_23 : f32 to vector<256x32xf32>
    %30 = arith.maximumf %28, %29 : vector<256x32xf32>
    %c0_24 = arith.constant 0 : index
    %c0_25 = arith.constant 0 : index
    %31 = vector.load %arg11[%c0_24, %c0_25] : memref<256x32xf32, #tpu.memory_space<vmem>>, vector<256x32xf32>
    tpu.vector_store %arg11[%c0_24, %c0_25], %30 {strides = array<i32>} : memref<256x32xf32, #tpu.memory_space<vmem>>, vector<256x32xf32>,
    return
  }
  func.func @transform_0(%arg0: i32) -> (i32, i32) {
    %c0_i32 = arith.constant 0 : i32
    %c0_i32_0 = arith.constant 0 : i32
    return %arg0, %c0_i32 : i32, i32
  }
  func.func @transform_1(%arg0: i32) -> (i32, i32) {
    %c0_i32 = arith.constant 0 : i32
    %c0_i32_0 = arith.constant 0 : i32
    return %arg0, %c0_i32 : i32, i32
  }
  func.func @transform_2(%arg0: i32) -> (i32, i32) {
    %c0_i32 = arith.constant 0 : i32
    %c0_i32_0 = arith.constant 0 : i32
    return %arg0, %c0_i32 : i32, i32
  }
  func.func @transform_3(%arg0: i32) -> (i32, i32) {
    %c0_i32 = arith.constant 0 : i32
    %c0_i32_0 = arith.constant 0 : i32
    %c0_i32_1 = arith.constant 0 : i32
    return %c0_i32, %c0_i32_0 : i32, i32
  }
  func.func @transform_4(%arg0: i32) -> (i32, i32) {
    %c0_i32 = arith.constant 0 : i32
    %c0_i32_0 = arith.constant 0 : i32
    %c0_i32_1 = arith.constant 0 : i32
    return %c0_i32, %c0_i32_0 : i32, i32
  }
  func.func @transform_5(%arg0: i32) -> (i32, i32) {
    %c0_i32 = arith.constant 0 : i32
    %c0_i32_0 = arith.constant 0 : i32
    %c0_i32_1 = arith.constant 0 : i32
    return %c0_i32, %c0_i32_0 : i32, i32
  }
  func.func @transform_6(%arg0: i32) -> (i32, i32) {
    %c0_i32 = arith.constant 0 : i32
    %c0_i32_0 = arith.constant 0 : i32
    %c0_i32_1 = arith.constant 0 : i32
    return %c0_i32, %c0_i32_0 : i32, i32
  }
  func.func @transform_7(%arg0: i32) -> (i32, i32) {
    %c0_i32 = arith.constant 0 : i32
    %c0_i32_0 = arith.constant 0 : i32
    %c0_i32_1 = arith.constant 0 : i32
    return %c0_i32, %c0_i32_0 : i32, i32
  }
  func.func @transform_8(%arg0: i32) -> (i32, i32) {
    %c0_i32 = arith.constant 0 : i32
    %c0_i32_0 = arith.constant 0 : i32
    %c0_i32_1 = arith.constant 0 : i32
    return %c0_i32, %c0_i32_0 : i32, i32
  }
  func.func @transform_9(%arg0: i32) -> (i32, i32) {
    %c0_i32 = arith.constant 0 : i32
    %c0_i32_0 = arith.constant 0 : i32
    return %arg0, %c0_i32 : i32, i32
  }
  func.func @transform_10(%arg0: i32) -> (i32, i32) {
    %c0_i32 = arith.constant 0 : i32
    %c0_i32_0 = arith.constant 0 : i32
    return %arg0, %c0_i32 : i32, i32
  }
}

</mosaic_0001>

<llo_original>
// kernel: mhea_forward.1
$region0: #{mhea_forward.1}
  #allocation0 [shape = 'u32[]', space=smem, size = 0x4, offset = 0x4, fixed_abs, tag = 'smem constant byte address 0x4 - core index']
  #allocation1 [shape = 'u32[144,128]{1,0:T(1,128)}', space=vmem, size = 0x12000, scoped, tag = 'internal scratch']
  %s0 = inlined_call_operand.vmem [shape: f32[512,32], index: 0, kind: input, shape index: {}]
  %s1 = inlined_call_operand.vmem [shape: f32[512,32], index: 1, kind: input, shape index: {}]
  %s2 = inlined_call_operand.vmem [shape: f32[512,32], index: 2, kind: input, shape index: {}]
  %s3 = inlined_call_operand.vmem [shape: bf16[32,32], index: 3, kind: input, shape index: {}]
  %s4 = inlined_call_operand.vmem [shape: f32[1,32], index: 4, kind: input, shape index: {}]
  %s5 = inlined_call_operand.vmem [shape: bf16[96,64], index: 5, kind: input, shape index: {}]
  %s6 = inlined_call_operand.vmem [shape: f32[1,64], index: 6, kind: input, shape index: {}]
  %s7 = inlined_call_operand.vmem [shape: bf16[64,32], index: 7, kind: input, shape index: {}]
  %s8 = inlined_call_operand.vmem [shape: f32[1,32], index: 8, kind: input, shape index: {}]
  %s9 = inlined_call_operand.vmem [shape: f32[512,32], index: 9, kind: output, shape index: {0}]
  %s10 = inlined_call_operand.vmem [shape: f32[512,32], index: 10, kind: output, shape index: {1}]
  %11 = xla_tuple %s9, %s10
  %s12 = sld [smem:[#allocation0]]
  $region77: #{mhea_forward.1} parent=0
    _
  %s14 = ssub.s32 1, %s12
  %s15 = scalar_select 0, %s14, %s12
  loop: start=0, step=1, limit=4
  $region2: #{mhea_forward.1} parent=0 // loop_pre_header
    _
  $region3: #{mhea_forward.1} parent=0 // loop_header
    %s17 = sphi 0, %s21
    %p18 = scmp.ge.s32.totalorder %s17, 4
    %s27 = sphi 0, %s29
    %s30 = sphi 0, %s27
    %s31 = sphi 0, %s30
    %s47 = sphi 0, %s31
    %s53 = sphi 0, %s55
    %s56 = sphi 0, %s53
    %s57 = sphi 0, %s56
    %s73 = sphi 0, %s57
    %s79 = sphi 0, %s81
    %s82 = sphi 0, %s79
    %s83 = sphi 0, %s82
    %s99 = sphi 0, %s83
    %s103 = sphi 0, %s103
    %s105 = sphi 0, %s103
    %s106 = sphi 0, %s105
    %s120 = sphi 0, %s106
    %s124 = sphi 0, %s124
    %s126 = sphi 0, %s124
    %s127 = sphi 0, %s126
    %s141 = sphi 0, %s127
    %s145 = sphi 0, %s145
    %s147 = sphi 0, %s145
    %s148 = sphi 0, %s147
    %s162 = sphi 0, %s148
    %s166 = sphi 0, %s166
    %s168 = sphi 0, %s166
    %s169 = sphi 0, %s168
    %s183 = sphi 0, %s169
    %s187 = sphi 0, %s187
    %s189 = sphi 0, %s187
    %s190 = sphi 0, %s189
    %s204 = sphi 0, %s190
    %s208 = sphi 0, %s208
    %s210 = sphi 0, %s208
    %s211 = sphi 0, %s210
    %s225 = sphi 0, %s211
    %s231 = sphi 0, %s233
    %s234 = sphi 0, %s231
    %s235 = sphi 0, %s234
    %s251 = sphi 0, %s235
    %s257 = sphi 0, %s259
    %s260 = sphi 0, %s257
    %s261 = sphi 0, %s260
    %s277 = sphi 0, %s261
  $region4: #{mhea_forward.1} parent=0 // loop_header_branch
    %20 = sbr.rel (%p18) target = $region8
  $region5: #{mhea_forward.1} parent=0 // loop_body
    %s22 = ssub.s32 %s17, 1
    %s23 = ssub.s32 %s17, 2
    %s24 = sadd.s32 %s17, 1
    %s25 = ssub.s32 %s17, %s24
    %p26 = scmp.eq.s32.totalorder %s25, 0
    %s28 = sadd.s32 %s27, 1
    %s29 = scalar_select %p26, %s27, %s28
    %p32 = pneg %p26
    %p33 = scmp.eq.s32.totalorder %s17, 1
    %p34 = por %p32, %p33
    %p35 = scmp.ne.s32.totalorder %s27, %s30
    %p36 = scmp.eq.s32.totalorder %s17, 0
    %p37 = por %p35, %p36
    %p38 = scmp.ne.s32.totalorder %s27, %s30
    %p39 = scmp.eq.s32.totalorder %s22, 1
    %p40 = por %p38, %p39
    %p41 = scmp.ne.s32.totalorder %s30, %s31
    %p42 = scmp.eq.s32.totalorder %s22, 0
    %p43 = por %p41, %p42
    %p44 = scmp.ne.s32.totalorder %s30, %s31
    %p45 = scmp.eq.s32.totalorder %s23, 1
    %p46 = por %p44, %p45
    %p48 = scmp.ne.s32.totalorder %s31, %s47
    %p49 = scmp.eq.s32.totalorder %s23, 0
    %p50 = por %p48, %p49
    %s51 = ssub.s32 %s17, %s24
    %p52 = scmp.eq.s32.totalorder %s51, 0
    %s54 = sadd.s32 %s53, 1
    %s55 = scalar_select %p52, %s53, %s54
    %p58 = pneg %p52
    %p59 = scmp.eq.s32.totalorder %s17, 1
    %p60 = por %p58, %p59
    %p61 = scmp.ne.s32.totalorder %s53, %s56
    %p62 = scmp.eq.s32.totalorder %s17, 0
    %p63 = por %p61, %p62
    %p64 = scmp.ne.s32.totalorder %s53, %s56
    %p65 = scmp.eq.s32.totalorder %s22, 1
    %p66 = por %p64, %p65
    %p67 = scmp.ne.s32.totalorder %s56, %s57
    %p68 = scmp.eq.s32.totalorder %s22, 0
    %p69 = por %p67, %p68
    %p70 = scmp.ne.s32.totalorder %s56, %s57
    %p71 = scmp.eq.s32.totalorder %s23, 1
    %p72 = por %p70, %p71
    %p74 = scmp.ne.s32.totalorder %s57, %s73
    %p75 = scmp.eq.s32.totalorder %s23, 0
    %p76 = por %p74, %p75
    %s77 = ssub.s32 %s17, %s24
    %p78 = scmp.eq.s32.totalorder %s77, 0
    %s80 = sadd.s32 %s79, 1
    %s81 = scalar_select %p78, %s79, %s80
    %p84 = pneg %p78
    %p85 = scmp.eq.s32.totalorder %s17, 1
    %p86 = por %p84, %p85
    %p87 = scmp.ne.s32.totalorder %s79, %s82
    %p88 = scmp.eq.s32.totalorder %s17, 0
    %p89 = por %p87, %p88
    %p90 = scmp.ne.s32.totalorder %s79, %s82
    %p91 = scmp.eq.s32.totalorder %s22, 1
    %p92 = por %p90, %p91
    %p93 = scmp.ne.s32.totalorder %s82, %s83
    %p94 = scmp.eq.s32.totalorder %s22, 0
    %p95 = por %p93, %p94
    %p96 = scmp.ne.s32.totalorder %s82, %s83
    %p97 = scmp.eq.s32.totalorder %s23, 1
    %p98 = por %p96, %p97
    %p100 = scmp.ne.s32.totalorder %s83, %s99
    %p101 = scmp.eq.s32.totalorder %s23, 0
    %p102 = por %p100, %p101
    %s104 = sadd.s32 %s103, 1
    %p107 = scmp.eq.s32.totalorder %s17, 1
    %p108 = scmp.ne.s32.totalorder %s103, %s105
    %p109 = scmp.eq.s32.totalorder %s17, 0
    %p110 = por %p108, %p109
    %p111 = scmp.ne.s32.totalorder %s103, %s105
    %p112 = scmp.eq.s32.totalorder %s22, 1
    %p113 = por %p111, %p112
    %p114 = scmp.ne.s32.totalorder %s105, %s106
    %p115 = scmp.eq.s32.totalorder %s22, 0
    %p116 = por %p114, %p115
    %p117 = scmp.ne.s32.totalorder %s105, %s106
    %p118 = scmp.eq.s32.totalorder %s23, 1
    %p119 = por %p117, %p118
    %p121 = scmp.ne.s32.totalorder %s106, %s120
    %p122 = scmp.eq.s32.totalorder %s23, 0
    %p123 = por %p121, %p122
    %s125 = sadd.s32 %s124, 1
    %p128 = scmp.eq.s32.totalorder %s17, 1
    %p129 = scmp.ne.s32.totalorder %s124, %s126
    %p130 = scmp.eq.s32.totalorder %s17, 0
    %p131 = por %p129, %p130
    %p132 = scmp.ne.s32.totalorder %s124, %s126
    %p133 = scmp.eq.s32.totalorder %s22, 1
    %p134 = por %p132, %p133
    %p135 = scmp.ne.s32.totalorder %s126, %s127
    %p136 = scmp.eq.s32.totalorder %s22, 0
    %p137 = por %p135, %p136
    %p138 = scmp.ne.s32.totalorder %s126, %s127
    %p139 = scmp.eq.s32.totalorder %s23, 1
    %p140 = por %p138, %p139
    %p142 = scmp.ne.s32.totalorder %s127, %s141
    %p143 = scmp.eq.s32.totalorder %s23, 0
    %p144 = por %p142, %p143
    %s146 = sadd.s32 %s145, 1
    %p149 = scmp.eq.s32.totalorder %s17, 1
    %p150 = scmp.ne.s32.totalorder %s145, %s147
    %p151 = scmp.eq.s32.totalorder %s17, 0
    %p152 = por %p150, %p151
    %p153 = scmp.ne.s32.totalorder %s145, %s147
    %p154 = scmp.eq.s32.totalorder %s22, 1
    %p155 = por %p153, %p154
    %p156 = scmp.ne.s32.totalorder %s147, %s148
    %p157 = scmp.eq.s32.totalorder %s22, 0
    %p158 = por %p156, %p157
    %p159 = scmp.ne.s32.totalorder %s147, %s148
    %p160 = scmp.eq.s32.totalorder %s23, 1
    %p161 = por %p159, %p160
    %p163 = scmp.ne.s32.totalorder %s148, %s162
    %p164 = scmp.eq.s32.totalorder %s23, 0
    %p165 = por %p163, %p164
    %s167 = sadd.s32 %s166, 1
    %p170 = scmp.eq.s32.totalorder %s17, 1
    %p171 = scmp.ne.s32.totalorder %s166, %s168
    %p172 = scmp.eq.s32.totalorder %s17, 0
    %p173 = por %p171, %p172
    %p174 = scmp.ne.s32.totalorder %s166, %s168
    %p175 = scmp.eq.s32.totalorder %s22, 1
    %p176 = por %p174, %p175
    %p177 = scmp.ne.s32.totalorder %s168, %s169
    %p178 = scmp.eq.s32.totalorder %s22, 0
    %p179 = por %p177, %p178
    %p180 = scmp.ne.s32.totalorder %s168, %s169
    %p181 = scmp.eq.s32.totalorder %s23, 1
    %p182 = por %p180, %p181
    %p184 = scmp.ne.s32.totalorder %s169, %s183
    %p185 = scmp.eq.s32.totalorder %s23, 0
    %p186 = por %p184, %p185
    %s188 = sadd.s32 %s187, 1
    %p191 = scmp.eq.s32.totalorder %s17, 1
    %p192 = scmp.ne.s32.totalorder %s187, %s189
    %p193 = scmp.eq.s32.totalorder %s17, 0
    %p194 = por %p192, %p193
    %p195 = scmp.ne.s32.totalorder %s187, %s189
    %p196 = scmp.eq.s32.totalorder %s22, 1
    %p197 = por %p195, %p196
    %p198 = scmp.ne.s32.totalorder %s189, %s190
    %p199 = scmp.eq.s32.totalorder %s22, 0
    %p200 = por %p198, %p199
    %p201 = scmp.ne.s32.totalorder %s189, %s190
    %p202 = scmp.eq.s32.totalorder %s23, 1
    %p203 = por %p201, %p202
    %p205 = scmp.ne.s32.totalorder %s190, %s204
    %p206 = scmp.eq.s32.totalorder %s23, 0
    %p207 = por %p205, %p206
    %s209 = sadd.s32 %s208, 1
    %p212 = scmp.eq.s32.totalorder %s17, 1
    %p213 = scmp.ne.s32.totalorder %s208, %s210
    %p214 = scmp.eq.s32.totalorder %s17, 0
    %p215 = por %p213, %p214
    %p216 = scmp.ne.s32.totalorder %s208, %s210
    %p217 = scmp.eq.s32.totalorder %s22, 1
    %p218 = por %p216, %p217
    %p219 = scmp.ne.s32.totalorder %s210, %s211
    %p220 = scmp.eq.s32.totalorder %s22, 0
    %p221 = por %p219, %p220
    %p222 = scmp.ne.s32.totalorder %s210, %s211
    %p223 = scmp.eq.s32.totalorder %s23, 1
    %p224 = por %p222, %p223
    %p226 = scmp.ne.s32.totalorder %s211, %s225
    %p227 = scmp.eq.s32.totalorder %s23, 0
    %p228 = por %p226, %p227
    %s229 = ssub.s32 %s17, %s24
    %p230 = scmp.eq.s32.totalorder %s229, 0
    %s232 = sadd.s32 %s231, 1
    %s233 = scalar_select %p230, %s231, %s232
    %p236 = pneg %p230
    %p237 = scmp.eq.s32.totalorder %s17, 1
    %p238 = por %p236, %p237
    %p239 = scmp.ne.s32.totalorder %s231, %s234
    %p240 = scmp.eq.s32.totalorder %s17, 0
    %p241 = por %p239, %p240
    %p242 = scmp.ne.s32.totalorder %s231, %s234
    %p243 = scmp.eq.s32.totalorder %s22, 1
    %p244 = por %p242, %p243
    %p245 = scmp.ne.s32.totalorder %s234, %s235
    %p246 = scmp.eq.s32.totalorder %s22, 0
    %p247 = por %p245, %p246
    %p248 = scmp.ne.s32.totalorder %s234, %s235
    %p249 = scmp.eq.s32.totalorder %s23, 1
    %p250 = por %p248, %p249
    %p252 = scmp.ne.s32.totalorder %s235, %s251
    %p253 = scmp.eq.s32.totalorder %s23, 0
    %p254 = por %p252, %p253
    %s255 = ssub.s32 %s17, %s24
    %p256 = scmp.eq.s32.totalorder %s255, 0
    %s258 = sadd.s32 %s257, 1
    %s259 = scalar_select %p256, %s257, %s258
    %p262 = pneg %p256
    %p263 = scmp.eq.s32.totalorder %s17, 1
    %p264 = por %p262, %p263
    %p265 = scmp.ne.s32.totalorder %s257, %s260
    %p266 = scmp.eq.s32.totalorder %s17, 0
    %p267 = por %p265, %p266
    %p268 = scmp.ne.s32.totalorder %s257, %s260
    %p269 = scmp.eq.s32.totalorder %s22, 1
    %p270 = por %p268, %p269
    %p271 = scmp.ne.s32.totalorder %s260, %s261
    %p272 = scmp.eq.s32.totalorder %s22, 0
    %p273 = por %p271, %p272
    %p274 = scmp.ne.s32.totalorder %s260, %s261
    %p275 = scmp.eq.s32.totalorder %s23, 1
    %p276 = por %p274, %p275
    %p278 = scmp.ne.s32.totalorder %s261, %s277
    %p279 = scmp.eq.s32.totalorder %s23, 0
    %p280 = por %p278, %p279
    %p281 = scmp.le.s32.totalorder 1, %s17
    %p282 = scmp.lt.s32.totalorder %s17, 3
    %p283 = pnand %p281, %p282
    %p284 = pneg %p283
    // Predicated region
    $region9: #{mhea_forward.1} parent=5 // pred_check
      _
    $region10: #{mhea_forward.1} parent=5 // pred_check_branch
      %286 = sbr.rel (%p283) target = $region12
    $region11: #{mhea_forward.1} parent=5 // pred_region
      %s287 = ssub.s32 %s17, 1
      // Predicated region
      $region13: #{mhea_forward.1} parent=11 // pred_check
        %p288 = pneg %p116
      $region14: #{mhea_forward.1} parent=11 // pred_check_branch
        %290 = sbr.rel (%p288) target = $region16
      $region15: #{mhea_forward.1} parent=11 // pred_region
        _
      $region16: #{mhea_forward.1} parent=11 // pred_fallthru
        _
      // Predicated region
      $region17: #{mhea_forward.1} parent=11 // pred_check
        %p291 = pneg %p137
      $region18: #{mhea_forward.1} parent=11 // pred_check_branch
        %293 = sbr.rel (%p291) target = $region20
      $region19: #{mhea_forward.1} parent=11 // pred_region
        _
      $region20: #{mhea_forward.1} parent=11 // pred_fallthru
        _
      // Predicated region
      $region21: #{mhea_forward.1} parent=11 // pred_check
        %p294 = pneg %p158
      $region22: #{mhea_forward.1} parent=11 // pred_check_branch
        %296 = sbr.rel (%p294) target = $region24
      $region23: #{mhea_forward.1} parent=11 // pred_region
        _
      $region24: #{mhea_forward.1} parent=11 // pred_fallthru
        _
      // Predicated region
      $region25: #{mhea_forward.1} parent=11 // pred_check
        %p297 = pneg %p179
      $region26: #{mhea_forward.1} parent=11 // pred_check_branch
        %299 = sbr.rel (%p297) target = $region28
      $region27: #{mhea_forward.1} parent=11 // pred_region
        _
      $region28: #{mhea_forward.1} parent=11 // pred_fallthru
        _
      // Predicated region
      $region29: #{mhea_forward.1} parent=11 // pred_check
        %p300 = pneg %p200
      $region30: #{mhea_forward.1} parent=11 // pred_check_branch
        %302 = sbr.rel (%p300) target = $region32
      $region31: #{mhea_forward.1} parent=11 // pred_region
        _
      $region32: #{mhea_forward.1} parent=11 // pred_fallthru
        _
      // Predicated region
      $region33: #{mhea_forward.1} parent=11 // pred_check
        %p303 = pneg %p221
      $region34: #{mhea_forward.1} parent=11 // pred_check_branch
        %305 = sbr.rel (%p303) target = $region36
      $region35: #{mhea_forward.1} parent=11 // pred_region
        _
      $region36: #{mhea_forward.1} parent=11 // pred_fallthru
        _
    $region12: #{mhea_forward.1} parent=5 // pred_fallthru
      _
    %p306 = scmp.lt.s32.totalorder %s17, 2
    // Predicated region
    $region37: #{mhea_forward.1} parent=5 // pred_check
      %p307 = pneg %p306
    $region38: #{mhea_forward.1} parent=5 // pred_check_branch
      %309 = sbr.rel (%p307) target = $region40
    $region39: #{mhea_forward.1} parent=5 // pred_region
      // Predicated region
      $region41: #{mhea_forward.1} parent=39 // pred_check
        %p310 = pneg %p37
      $region42: #{mhea_forward.1} parent=39 // pred_check_branch
        %312 = sbr.rel (%p310) target = $region44
      $region43: #{mhea_forward.1} parent=39 // pred_region
        %s313 = smul.u32 32, %s17
        %p314 = scmp.lt.s32.totalorder %s313, 63
        %s315 = scalar_select %p314, %s313, 63
        %s316 = smul.addr %s315, 8
        %s317 = scalar_lea.vmem %s0, %s316
        %s318 = smul.u32 32, %s17
      $region44: #{mhea_forward.1} parent=39 // pred_fallthru
        _
      // Predicated region
      $region45: #{mhea_forward.1} parent=39 // pred_check
        %p319 = pneg %p63
      $region46: #{mhea_forward.1} parent=39 // pred_check_branch
        %321 = sbr.rel (%p319) target = $region48
      $region47: #{mhea_forward.1} parent=39 // pred_region
        %s322 = smul.u32 32, %s17
        %p323 = scmp.lt.s32.totalorder %s322, 63
        %s324 = scalar_select %p323, %s322, 63
        %s325 = smul.addr %s324, 8
        %s326 = scalar_lea.vmem %s1, %s325
        %s327 = smul.u32 32, %s17
      $region48: #{mhea_forward.1} parent=39 // pred_fallthru
        _
      // Predicated region
      $region49: #{mhea_forward.1} parent=39 // pred_check
        %p328 = pneg %p89
      $region50: #{mhea_forward.1} parent=39 // pred_check_branch
        %330 = sbr.rel (%p328) target = $region52
      $region51: #{mhea_forward.1} parent=39 // pred_region
        %s331 = smul.u32 32, %s17
        %p332 = scmp.lt.s32.totalorder %s331, 63
        %s333 = scalar_select %p332, %s331, 63
        %s334 = smul.addr %s333, 8
        %s335 = scalar_lea.vmem %s2, %s334
        %s336 = smul.u32 32, %s17
      $region52: #{mhea_forward.1} parent=39 // pred_fallthru
        _
    $region40: #{mhea_forward.1} parent=5 // pred_fallthru
      _
    %p337 = scmp.le.s32.totalorder 1, %s17
    %p338 = scmp.lt.s32.totalorder %s17, 3
    %p339 = pnand %p337, %p338
    %p340 = pneg %p339
    // Predicated region
    $region53: #{mhea_forward.1} parent=5 // pred_check
      _
    $region54: #{mhea_forward.1} parent=5 // pred_check_branch
      %342 = sbr.rel (%p339) target = $region56
    $region55: #{mhea_forward.1} parent=5 // pred_region
      %s343 = ssub.s32 %s17, 1
      %s344 = smul.u32 32, %s22
      %p345 = scmp.lt.s32.totalorder %s344, 63
      %s346 = scalar_select %p345, %s344, 63
      %s347 = smul.addr %s346, 8
      %s348 = scalar_lea.vmem %s0, %s347
      %p349 = pneg %p43
      %p350 = pneg %p40
      %s351 = smul.u32 32, %s22
      %p352 = scmp.lt.s32.totalorder %s351, 63
      %s353 = scalar_select %p352, %s351, 63
      %s354 = smul.addr %s353, 8
      %s355 = scalar_lea.vmem %s1, %s354
      %p356 = pneg %p69
      %p357 = pneg %p66
      %s358 = smul.u32 32, %s22
      %p359 = scmp.lt.s32.totalorder %s358, 63
      %s360 = scalar_select %p359, %s358, 63
      %s361 = smul.addr %s360, 8
      %s362 = scalar_lea.vmem %s2, %s361
      %p363 = pneg %p95
      %p364 = pneg %p92
      %p365 = pneg %p116
      %p366 = pneg %p113
      %p367 = pneg %p137
      %p368 = pneg %p134
      %p369 = pneg %p158
      %p370 = pneg %p155
      %p371 = pneg %p179
      %p372 = pneg %p176
      %p373 = pneg %p200
      %p374 = pneg %p197
      %p375 = pneg %p221
      %p376 = pneg %p218
      %p377 = pneg %p247
      %p378 = pneg %p244
      %s379 = smul.u32 32, %s22
      %p380 = scmp.lt.s32.totalorder %s379, 63
      %s381 = scalar_select %p380, %s379, 63
      %s382 = smul.addr %s381, 8
      %s383 = scalar_lea.vmem %s9, %s382
      %p384 = pneg %p273
      %p385 = pneg %p270
      %s386 = smul.u32 32, %s22
      %p387 = scmp.lt.s32.totalorder %s386, 63
      %s388 = scalar_select %p387, %s386, 63
      %s389 = smul.addr %s388, 8
      %s390 = scalar_lea.vmem %s10, %s389
      %s391 = smul.u32 32, %s22
      %p392 = scmp.lt.s32.totalorder %s391, 63
      %s393 = scalar_select %p392, %s391, 63
      %s394 = smul.addr %s393, 8
      %s395 = scalar_lea.vmem %s0, %s394
      %s396 = smul.u32 32, %s22
      %s397 = smul.u32 32, %s22
      %p398 = scmp.lt.s32.totalorder %s397, 63
      %s399 = scalar_select %p398, %s397, 63
      %s400 = smul.addr %s399, 8
      %s401 = scalar_lea.vmem %s1, %s400
      %s402 = smul.u32 32, %s22
      %s403 = smul.u32 32, %s22
      %p404 = scmp.lt.s32.totalorder %s403, 63
      %s405 = scalar_select %p404, %s403, 63
      %s406 = smul.addr %s405, 8
      %s407 = scalar_lea.vmem %s2, %s406
      %s408 = smul.u32 32, %s22
      %s409 = smul.u32 32, %s22
      %p410 = scmp.lt.s32.totalorder %s409, 63
      %s411 = scalar_select %p410, %s409, 63
      %s412 = smul.addr %s411, 8
      %s413 = scalar_lea.vmem %s9, %s412
      %s414 = smul.u32 32, %s22
      %s415 = smul.u32 32, %s22
      %p416 = scmp.lt.s32.totalorder %s415, 63
      %s417 = scalar_select %p416, %s415, 63
      %s418 = smul.addr %s417, 8
      %s419 = scalar_lea.vmem %s10, %s418
      %s420 = smul.u32 32, %s22
      %v422 = vld [vmem:[%s395] sm:$0xff]
      %v423 = vld [vmem:[%s395 + $0x8] sm:$0xff]
      %v424 = vld [vmem:[%s395 + $0x10] sm:$0xff]
      %v425 = vld [vmem:[%s395 + $0x18] sm:$0xff]
      %v426 = vld [vmem:[%s395 + $0x20] sm:$0xff]
      %v427 = vld [vmem:[%s395 + $0x28] sm:$0xff]
      %v428 = vld [vmem:[%s395 + $0x30] sm:$0xff]
      %v429 = vld [vmem:[%s395 + $0x38] sm:$0xff]
      %v430 = vld [vmem:[%s395 + $0x40] sm:$0xff]
      %v431 = vld [vmem:[%s395 + $0x48] sm:$0xff]
      %v432 = vld [vmem:[%s395 + $0x50] sm:$0xff]
      %v433 = vld [vmem:[%s395 + $0x58] sm:$0xff]
      %v434 = vld [vmem:[%s395 + $0x60] sm:$0xff]
      %v435 = vld [vmem:[%s395 + $0x68] sm:$0xff]
      %v436 = vld [vmem:[%s395 + $0x70] sm:$0xff]
      %v437 = vld [vmem:[%s395 + $0x78] sm:$0xff]
      %v438 = vld [vmem:[%s395 + $0x80] sm:$0xff]
      %v439 = vld [vmem:[%s395 + $0x88] sm:$0xff]
      %v440 = vld [vmem:[%s395 + $0x90] sm:$0xff]
      %v441 = vld [vmem:[%s395 + $0x98] sm:$0xff]
      %v442 = vld [vmem:[%s395 + $0xa0] sm:$0xff]
      %v443 = vld [vmem:[%s395 + $0xa8] sm:$0xff]
      %v444 = vld [vmem:[%s395 + $0xb0] sm:$0xff]
      %v445 = vld [vmem:[%s395 + $0xb8] sm:$0xff]
      %v446 = vld [vmem:[%s395 + $0xc0] sm:$0xff]
      %v447 = vld [vmem:[%s395 + $0xc8] sm:$0xff]
      %v448 = vld [vmem:[%s395 + $0xd0] sm:$0xff]
      %v449 = vld [vmem:[%s395 + $0xd8] sm:$0xff]
      %v450 = vld [vmem:[%s395 + $0xe0] sm:$0xff]
      %v451 = vld [vmem:[%s395 + $0xe8] sm:$0xff]
      %v452 = vld [vmem:[%s395 + $0xf0] sm:$0xff]
      %v453 = vld [vmem:[%s395 + $0xf8] sm:$0xff]
      %v454 = vpack.c.bf16 %v423, %v422
      %v455 = vpack.c.bf16 %v425, %v424
      %v456 = vpack.c.bf16 %v427, %v426
      %v457 = vpack.c.bf16 %v429, %v428
      %v458 = vpack.c.bf16 %v431, %v430
      %v459 = vpack.c.bf16 %v433, %v432
      %v460 = vpack.c.bf16 %v435, %v434
      %v461 = vpack.c.bf16 %v437, %v436
      %v462 = vpack.c.bf16 %v439, %v438
      %v463 = vpack.c.bf16 %v441, %v440
      %v464 = vpack.c.bf16 %v443, %v442
      %v465 = vpack.c.bf16 %v445, %v444
      %v466 = vpack.c.bf16 %v447, %v446
      %v467 = vpack.c.bf16 %v449, %v448
      %v468 = vpack.c.bf16 %v451, %v450
      %v469 = vpack.c.bf16 %v453, %v452
      %v470 = vld [vmem:[%s401] sm:$0xff]
      %v471 = vld [vmem:[%s401 + $0x8] sm:$0xff]
      %v472 = vld [vmem:[%s401 + $0x10] sm:$0xff]
      %v473 = vld [vmem:[%s401 + $0x18] sm:$0xff]
      %v474 = vld [vmem:[%s401 + $0x20] sm:$0xff]
      %v475 = vld [vmem:[%s401 + $0x28] sm:$0xff]
      %v476 = vld [vmem:[%s401 + $0x30] sm:$0xff]
      %v477 = vld [vmem:[%s401 + $0x38] sm:$0xff]
      %v478 = vld [vmem:[%s401 + $0x40] sm:$0xff]
      %v479 = vld [vmem:[%s401 + $0x48] sm:$0xff]
      %v480 = vld [vmem:[%s401 + $0x50] sm:$0xff]
      %v481 = vld [vmem:[%s401 + $0x58] sm:$0xff]
      %v482 = vld [vmem:[%s401 + $0x60] sm:$0xff]
      %v483 = vld [vmem:[%s401 + $0x68] sm:$0xff]
      %v484 = vld [vmem:[%s401 + $0x70] sm:$0xff]
      %v485 = vld [vmem:[%s401 + $0x78] sm:$0xff]
      %v486 = vld [vmem:[%s401 + $0x80] sm:$0xff]
      %v487 = vld [vmem:[%s401 + $0x88] sm:$0xff]
      %v488 = vld [vmem:[%s401 + $0x90] sm:$0xff]
      %v489 = vld [vmem:[%s401 + $0x98] sm:$0xff]
      %v490 = vld [vmem:[%s401 + $0xa0] sm:$0xff]
      %v491 = vld [vmem:[%s401 + $0xa8] sm:$0xff]
      %v492 = vld [vmem:[%s401 + $0xb0] sm:$0xff]
      %v493 = vld [vmem:[%s401 + $0xb8] sm:$0xff]
      %v494 = vld [vmem:[%s401 + $0xc0] sm:$0xff]
      %v495 = vld [vmem:[%s401 + $0xc8] sm:$0xff]
      %v496 = vld [vmem:[%s401 + $0xd0] sm:$0xff]
      %v497 = vld [vmem:[%s401 + $0xd8] sm:$0xff]
      %v498 = vld [vmem:[%s401 + $0xe0] sm:$0xff]
      %v499 = vld [vmem:[%s401 + $0xe8] sm:$0xff]
      %v500 = vld [vmem:[%s401 + $0xf0] sm:$0xff]
      %v501 = vld [vmem:[%s401 + $0xf8] sm:$0xff]
      %v502 = vpack.c.bf16 %v471, %v470
      %v503 = vpack.c.bf16 %v473, %v472
      %v504 = vpack.c.bf16 %v475, %v474
      %v505 = vpack.c.bf16 %v477, %v476
      %v506 = vpack.c.bf16 %v479, %v478
      %v507 = vpack.c.bf16 %v481, %v480
      %v508 = vpack.c.bf16 %v483, %v482
      %v509 = vpack.c.bf16 %v485, %v484
      %v510 = vpack.c.bf16 %v487, %v486
      %v511 = vpack.c.bf16 %v489, %v488
      %v512 = vpack.c.bf16 %v491, %v490
      %v513 = vpack.c.bf16 %v493, %v492
      %v514 = vpack.c.bf16 %v495, %v494
      %v515 = vpack.c.bf16 %v497, %v496
      %v516 = vpack.c.bf16 %v499, %v498
      %v517 = vpack.c.bf16 %v501, %v500
      %v518 = vld [vmem:[%s407] sm:$0xff]
      %v519 = vld [vmem:[%s407 + $0x8] sm:$0xff]
      %v520 = vld [vmem:[%s407 + $0x10] sm:$0xff]
      %v521 = vld [vmem:[%s407 + $0x18] sm:$0xff]
      %v522 = vld [vmem:[%s407 + $0x20] sm:$0xff]
      %v523 = vld [vmem:[%s407 + $0x28] sm:$0xff]
      %v524 = vld [vmem:[%s407 + $0x30] sm:$0xff]
      %v525 = vld [vmem:[%s407 + $0x38] sm:$0xff]
      %v526 = vld [vmem:[%s407 + $0x40] sm:$0xff]
      %v527 = vld [vmem:[%s407 + $0x48] sm:$0xff]
      %v528 = vld [vmem:[%s407 + $0x50] sm:$0xff]
      %v529 = vld [vmem:[%s407 + $0x58] sm:$0xff]
      %v530 = vld [vmem:[%s407 + $0x60] sm:$0xff]
      %v531 = vld [vmem:[%s407 + $0x68] sm:$0xff]
      %v532 = vld [vmem:[%s407 + $0x70] sm:$0xff]
      %v533 = vld [vmem:[%s407 + $0x78] sm:$0xff]
      %v534 = vld [vmem:[%s407 + $0x80] sm:$0xff]
      %v535 = vld [vmem:[%s407 + $0x88] sm:$0xff]
      %v536 = vld [vmem:[%s407 + $0x90] sm:$0xff]
      %v537 = vld [vmem:[%s407 + $0x98] sm:$0xff]
      %v538 = vld [vmem:[%s407 + $0xa0] sm:$0xff]
      %v539 = vld [vmem:[%s407 + $0xa8] sm:$0xff]
      %v540 = vld [vmem:[%s407 + $0xb0] sm:$0xff]
      %v541 = vld [vmem:[%s407 + $0xb8] sm:$0xff]
      %v542 = vld [vmem:[%s407 + $0xc0] sm:$0xff]
      %v543 = vld [vmem:[%s407 + $0xc8] sm:$0xff]
      %v544 = vld [vmem:[%s407 + $0xd0] sm:$0xff]
      %v545 = vld [vmem:[%s407 + $0xd8] sm:$0xff]
      %v546 = vld [vmem:[%s407 + $0xe0] sm:$0xff]
      %v547 = vld [vmem:[%s407 + $0xe8] sm:$0xff]
      %v548 = vld [vmem:[%s407 + $0xf0] sm:$0xff]
      %v549 = vld [vmem:[%s407 + $0xf8] sm:$0xff]
      %v550 = vpack.c.bf16 %v519, %v518
      %v551 = vpack.c.bf16 %v521, %v520
      %v552 = vpack.c.bf16 %v523, %v522
      %v553 = vpack.c.bf16 %v525, %v524
      %v554 = vpack.c.bf16 %v527, %v526
      %v555 = vpack.c.bf16 %v529, %v528
      %v556 = vpack.c.bf16 %v531, %v530
      %v557 = vpack.c.bf16 %v533, %v532
      %v558 = vpack.c.bf16 %v535, %v534
      %v559 = vpack.c.bf16 %v537, %v536
      %v560 = vpack.c.bf16 %v539, %v538
      %v561 = vpack.c.bf16 %v541, %v540
      %v562 = vpack.c.bf16 %v543, %v542
      %v563 = vpack.c.bf16 %v545, %v544
      %v564 = vpack.c.bf16 %v547, %v546
      %v565 = vpack.c.bf16 %v549, %v548
      %v566 = vld [vmem:[%s3] sm:$0xf]
      %v567 = vld [vmem:[%s3 + $0x4] sm:$0xf]
      %v568 = vld [vmem:[%s3 + $0x8] sm:$0xf]
      %v569 = vld [vmem:[%s3 + $0xc] sm:$0xf]
      %v570 = vld [vmem:[%s4] sm:$0x1]
      %v572 = vlaneseq
      %v573 = vshrl.u32 %v572, 7
      %v574 = vsub.s32 0, %v573
      %v575 = vrot.slane %v570, %v574
      %v581 = vunpack.c.l.b16 %v566
      %v582 = vunpack.c.l.b16 %v567
      %v583 = vunpack.c.l.b16 %v568
      %v584 = vunpack.c.l.b16 %v569
      %v585 = vpack.c.b16 %v582, %v581
      %v586 = vpack.c.b16 %v584, %v583
      %vm589 = vcmask 261120
      %v591 = vsel %vm589, %v550, 0
      %v594 = vsel %vm589, %v551, 0
      %v597 = vsel %vm589, %v552, 0
      %v600 = vsel %vm589, %v553, 0
      %v603 = vsel %vm589, %v554, 0
      %v606 = vsel %vm589, %v555, 0
      %v609 = vsel %vm589, %v556, 0
      %v612 = vsel %vm589, %v557, 0
      %v615 = vsel %vm589, %v558, 0
      %v618 = vsel %vm589, %v559, 0
      %v621 = vsel %vm589, %v560, 0
      %v624 = vsel %vm589, %v561, 0
      %v627 = vsel %vm589, %v562, 0
      %v630 = vsel %vm589, %v563, 0
      %v633 = vsel %vm589, %v564, 0
      %v636 = vsel %vm589, %v565, 0
      %638 = vmatprep.subr.bf16.mxu0 0
      %639 = vmatpush1.bf16.msra.mxu0 0
      %640 = vmatprep.subr.bf16.mxu0 0
      %641 = vmatpush1.bf16.msra.mxu0 0
      %642 = vmatprep.subr.bf16.mxu0 0
      %643 = vmatpush1.bf16.msra.mxu0 0
      %644 = vmatprep.subr.bf16.mxu0 0
      %645 = vmatpush1.bf16.msra.mxu0 0
      %646 = vmatprep.subr.bf16.mxu0 0
      %647 = vmatpush1.bf16.msra.mxu0 0
      %648 = vmatprep.subr.bf16.mxu0 0
      %649 = vmatpush1.bf16.msra.mxu0 0
      %650 = vmatprep.subr.bf16.mxu0 0
      %651 = vmatpush1.bf16.msra.mxu0 %v586
      %652 = vmatprep.subr.bf16.mxu0 0
      %653 = vmatpush1.bf16.msra.mxu0 %v585
      %654 = vmatprep.subr.bf16.mxu0 0
      %655 = vmatpush2.bf16.msra.mxu0 0
      %656 = vmatprep.subr.bf16.mxu0 0
      %657 = vmatpush2.bf16.msra.mxu0 0
      %658 = vmatprep.subr.bf16.mxu0 0
      %659 = vmatpush2.bf16.msra.mxu0 0
      %660 = vmatprep.subr.bf16.mxu0 0
      %661 = vmatpush2.bf16.msra.mxu0 0
      %662 = vmatprep.subr.bf16.mxu0 0
      %663 = vmatpush2.bf16.msra.mxu0 0
      %664 = vmatprep.subr.bf16.mxu0 0
      %665 = vmatpush2.bf16.msra.mxu0 0
      %666 = vmatprep.subr.bf16.mxu0 0
      %667 = vmatpush2.bf16.msra.mxu0 0
      %668 = vmatprep.subr.bf16.mxu0 0
      %669 = vmatpush2.bf16.msra.mxu0 0
      %670 = vmatprep.mubr.bf16.mxu0 0
      %671 = vmatmul.mubr.bf16.gmra.mxu0 %v591
      %v672 = vpop.f32.mrf.mxu0
      %v673 = vadd.f32 %v575, %v672
      %v674 = vpop.f32.mrf.mxu0
      %v675 = vpop.f32.mrf.mxu0
      %v676 = vadd.f32 %v575, %v675
      %v677 = vpop.f32.mrf.mxu0
      %678 = vmatprep.mubr.bf16.mxu0 0
      %679 = vmatmul.mubr.bf16.gmra.mxu0 %v594
      %v680 = vpop.f32.mrf.mxu0
      %v681 = vadd.f32 %v575, %v680
      %v682 = vpop.f32.mrf.mxu0
      %v683 = vpop.f32.mrf.mxu0
      %v684 = vadd.f32 %v575, %v683
      %v685 = vpop.f32.mrf.mxu0
      %686 = vmatprep.mubr.bf16.mxu0 0
      %687 = vmatmul.mubr.bf16.gmra.mxu0 %v597
      %v688 = vpop.f32.mrf.mxu0
      %v689 = vadd.f32 %v575, %v688
      %v690 = vpop.f32.mrf.mxu0
      %v691 = vpop.f32.mrf.mxu0
      %v692 = vadd.f32 %v575, %v691
      %v693 = vpop.f32.mrf.mxu0
      %694 = vmatprep.mubr.bf16.mxu0 0
      %695 = vmatmul.mubr.bf16.gmra.mxu0 %v600
      %v696 = vpop.f32.mrf.mxu0
      %v697 = vadd.f32 %v575, %v696
      %v698 = vpop.f32.mrf.mxu0
      %v699 = vpop.f32.mrf.mxu0
      %v700 = vadd.f32 %v575, %v699
      %v701 = vpop.f32.mrf.mxu0
      %702 = vmatprep.mubr.bf16.mxu0 0
      %703 = vmatmul.mubr.bf16.gmra.mxu0 %v603
      %v704 = vpop.f32.mrf.mxu0
      %v705 = vadd.f32 %v575, %v704
      %v706 = vpop.f32.mrf.mxu0
      %v707 = vpop.f32.mrf.mxu0
      %v708 = vadd.f32 %v575, %v707
      %v709 = vpop.f32.mrf.mxu0
      %710 = vmatprep.mubr.bf16.mxu0 0
      %711 = vmatmul.mubr.bf16.gmra.mxu0 %v606
      %v712 = vpop.f32.mrf.mxu0
      %v713 = vadd.f32 %v575, %v712
      %v714 = vpop.f32.mrf.mxu0
      %v715 = vpop.f32.mrf.mxu0
      %v716 = vadd.f32 %v575, %v715
      %v717 = vpop.f32.mrf.mxu0
      %718 = vmatprep.mubr.bf16.mxu0 0
      %719 = vmatmul.mubr.bf16.gmra.mxu0 %v609
      %v720 = vpop.f32.mrf.mxu0
      %v721 = vadd.f32 %v575, %v720
      %v722 = vpop.f32.mrf.mxu0
      %v723 = vpop.f32.mrf.mxu0
      %v724 = vadd.f32 %v575, %v723
      %v725 = vpop.f32.mrf.mxu0
      %726 = vmatprep.mubr.bf16.mxu0 0
      %727 = vmatmul.mubr.bf16.gmra.mxu0 %v612
      %v728 = vpop.f32.mrf.mxu0
      %v729 = vadd.f32 %v575, %v728
      %v730 = vpop.f32.mrf.mxu0
      %v731 = vpop.f32.mrf.mxu0
      %v732 = vadd.f32 %v575, %v731
      %v733 = vpop.f32.mrf.mxu0
      %734 = vmatprep.mubr.bf16.mxu0 0
      %735 = vmatmul.mubr.bf16.gmra.mxu0 %v615
      %v736 = vpop.f32.mrf.mxu0
      %v737 = vadd.f32 %v575, %v736
      %v738 = vpop.f32.mrf.mxu0
      %v739 = vpop.f32.mrf.mxu0
      %v740 = vadd.f32 %v575, %v739
      %v741 = vpop.f32.mrf.mxu0
      %742 = vmatprep.mubr.bf16.mxu0 0
      %743 = vmatmul.mubr.bf16.gmra.mxu0 %v618
      %v744 = vpop.f32.mrf.mxu0
      %v745 = vadd.f32 %v575, %v744
      %v746 = vpop.f32.mrf.mxu0
      %v747 = vpop.f32.mrf.mxu0
      %v748 = vadd.f32 %v575, %v747
      %v749 = vpop.f32.mrf.mxu0
      %750 = vmatprep.mubr.bf16.mxu0 0
      %751 = vmatmul.mubr.bf16.gmra.mxu0 %v621
      %v752 = vpop.f32.mrf.mxu0
      %v753 = vadd.f32 %v575, %v752
      %v754 = vpop.f32.mrf.mxu0
      %v755 = vpop.f32.mrf.mxu0
      %v756 = vadd.f32 %v575, %v755
      %v757 = vpop.f32.mrf.mxu0
      %758 = vmatprep.mubr.bf16.mxu0 0
      %759 = vmatmul.mubr.bf16.gmra.mxu0 %v624
      %v760 = vpop.f32.mrf.mxu0
      %v761 = vadd.f32 %v575, %v760
      %v762 = vpop.f32.mrf.mxu0
      %v763 = vpop.f32.mrf.mxu0
      %v764 = vadd.f32 %v575, %v763
      %v765 = vpop.f32.mrf.mxu0
      %766 = vmatprep.mubr.bf16.mxu0 0
      %767 = vmatmul.mubr.bf16.gmra.mxu0 %v627
      %v768 = vpop.f32.mrf.mxu0
      %v769 = vadd.f32 %v575, %v768
      %v770 = vpop.f32.mrf.mxu0
      %v771 = vpop.f32.mrf.mxu0
      %v772 = vadd.f32 %v575, %v771
      %v773 = vpop.f32.mrf.mxu0
      %774 = vmatprep.mubr.bf16.mxu0 0
      %775 = vmatmul.mubr.bf16.gmra.mxu0 %v630
      %v776 = vpop.f32.mrf.mxu0
      %v777 = vadd.f32 %v575, %v776
      %v778 = vpop.f32.mrf.mxu0
      %v779 = vpop.f32.mrf.mxu0
      %v780 = vadd.f32 %v575, %v779
      %v781 = vpop.f32.mrf.mxu0
      %782 = vmatprep.mubr.bf16.mxu0 0
      %783 = vmatmul.mubr.bf16.gmra.mxu0 %v633
      %v784 = vpop.f32.mrf.mxu0
      %v785 = vadd.f32 %v575, %v784
      %v786 = vpop.f32.mrf.mxu0
      %v787 = vpop.f32.mrf.mxu0
      %v788 = vadd.f32 %v575, %v787
      %v789 = vpop.f32.mrf.mxu0
      %790 = vmatprep.mubr.bf16.mxu0 0
      %791 = vmatmul.mubr.bf16.gmra.mxu0 %v636
      %v792 = vpop.f32.mrf.mxu0
      %v793 = vadd.f32 %v575, %v792
      %v794 = vpop.f32.mrf.mxu0
      %v795 = vpop.f32.mrf.mxu0
      %v796 = vadd.f32 %v575, %v795
      %v797 = vpop.f32.mrf.mxu0
      %798 = vdwg.mxu0
      %v799 = vmax.f32 %v673, 0.0
      %v800 = vmax.f32 %v676, 0.0
      %v801 = vmax.f32 %v681, 0.0
      %v802 = vmax.f32 %v684, 0.0
      %v803 = vmax.f32 %v689, 0.0
      %v804 = vmax.f32 %v692, 0.0
      %v805 = vmax.f32 %v697, 0.0
      %v806 = vmax.f32 %v700, 0.0
      %v807 = vmax.f32 %v705, 0.0
      %v808 = vmax.f32 %v708, 0.0
      %v809 = vmax.f32 %v713, 0.0
      %v810 = vmax.f32 %v716, 0.0
      %v811 = vmax.f32 %v721, 0.0
      %v812 = vmax.f32 %v724, 0.0
      %v813 = vmax.f32 %v729, 0.0
      %v814 = vmax.f32 %v732, 0.0
      %v815 = vmax.f32 %v737, 0.0
      %v816 = vmax.f32 %v740, 0.0
      %v817 = vmax.f32 %v745, 0.0
      %v818 = vmax.f32 %v748, 0.0
      %v819 = vmax.f32 %v753, 0.0
      %v820 = vmax.f32 %v756, 0.0
      %v821 = vmax.f32 %v761, 0.0
      %v822 = vmax.f32 %v764, 0.0
      %v823 = vmax.f32 %v769, 0.0
      %v824 = vmax.f32 %v772, 0.0
      %v825 = vmax.f32 %v777, 0.0
      %v826 = vmax.f32 %v780, 0.0
      %v827 = vmax.f32 %v785, 0.0
      %v828 = vmax.f32 %v788, 0.0
      %v829 = vmax.f32 %v793, 0.0
      %v830 = vmax.f32 %v796, 0.0
      %831 = vst.msk [vmem:[%s413] sm:$0xff] %vm589, %v799
      %832 = vst.msk [vmem:[%s413 + $0x8] sm:$0xff] %vm589, %v800
      %833 = vst.msk [vmem:[%s413 + $0x10] sm:$0xff] %vm589, %v801
      %834 = vst.msk [vmem:[%s413 + $0x18] sm:$0xff] %vm589, %v802
      %835 = vst.msk [vmem:[%s413 + $0x20] sm:$0xff] %vm589, %v803
      %836 = vst.msk [vmem:[%s413 + $0x28] sm:$0xff] %vm589, %v804
      %837 = vst.msk [vmem:[%s413 + $0x30] sm:$0xff] %vm589, %v805
      %838 = vst.msk [vmem:[%s413 + $0x38] sm:$0xff] %vm589, %v806
      %839 = vst.msk [vmem:[%s413 + $0x40] sm:$0xff] %vm589, %v807
      %840 = vst.msk [vmem:[%s413 + $0x48] sm:$0xff] %vm589, %v808
      %841 = vst.msk [vmem:[%s413 + $0x50] sm:$0xff] %vm589, %v809
      %842 = vst.msk [vmem:[%s413 + $0x58] sm:$0xff] %vm589, %v810
      %843 = vst.msk [vmem:[%s413 + $0x60] sm:$0xff] %vm589, %v811
      %844 = vst.msk [vmem:[%s413 + $0x68] sm:$0xff] %vm589, %v812
      %845 = vst.msk [vmem:[%s413 + $0x70] sm:$0xff] %vm589, %v813
      %846 = vst.msk [vmem:[%s413 + $0x78] sm:$0xff] %vm589, %v814
      %847 = vst.msk [vmem:[%s413 + $0x80] sm:$0xff] %vm589, %v815
      %848 = vst.msk [vmem:[%s413 + $0x88] sm:$0xff] %vm589, %v816
      %849 = vst.msk [vmem:[%s413 + $0x90] sm:$0xff] %vm589, %v817
      %850 = vst.msk [vmem:[%s413 + $0x98] sm:$0xff] %vm589, %v818
      %851 = vst.msk [vmem:[%s413 + $0xa0] sm:$0xff] %vm589, %v819
      %852 = vst.msk [vmem:[%s413 + $0xa8] sm:$0xff] %vm589, %v820
      %853 = vst.msk [vmem:[%s413 + $0xb0] sm:$0xff] %vm589, %v821
      %854 = vst.msk [vmem:[%s413 + $0xb8] sm:$0xff] %vm589, %v822
      %855 = vst.msk [vmem:[%s413 + $0xc0] sm:$0xff] %vm589, %v823
      %856 = vst.msk [vmem:[%s413 + $0xc8] sm:$0xff] %vm589, %v824
      %857 = vst.msk [vmem:[%s413 + $0xd0] sm:$0xff] %vm589, %v825
      %858 = vst.msk [vmem:[%s413 + $0xd8] sm:$0xff] %vm589, %v826
      %859 = vst.msk [vmem:[%s413 + $0xe0] sm:$0xff] %vm589, %v827
      %860 = vst.msk [vmem:[%s413 + $0xe8] sm:$0xff] %vm589, %v828
      %861 = vst.msk [vmem:[%s413 + $0xf0] sm:$0xff] %vm589, %v829
      %862 = vst.msk [vmem:[%s413 + $0xf8] sm:$0xff] %vm589, %v830
      %v863 = vpack.c.bf16 %v800, %v799
      %v864 = vpack.c.bf16 %v802, %v801
      %v865 = vpack.c.bf16 %v804, %v803
      %v866 = vpack.c.bf16 %v806, %v805
      %v867 = vpack.c.bf16 %v808, %v807
      %v868 = vpack.c.bf16 %v810, %v809
      %v869 = vpack.c.bf16 %v812, %v811
      %v870 = vpack.c.bf16 %v814, %v813
      %v871 = vpack.c.bf16 %v816, %v815
      %v872 = vpack.c.bf16 %v818, %v817
      %v873 = vpack.c.bf16 %v820, %v819
      %v874 = vpack.c.bf16 %v822, %v821
      %v875 = vpack.c.bf16 %v824, %v823
      %v876 = vpack.c.bf16 %v826, %v825
      %v877 = vpack.c.bf16 %v828, %v827
      %v878 = vpack.c.bf16 %v830, %v829
      %895 = vrot.lane.b32.xlu0 %v502, 32
      %v896 = vpop.permute.xlu0 %895
      %897 = vrot.lane.b32.xlu0 %v503, 32
      %v898 = vpop.permute.xlu0 %897
      %899 = vrot.lane.b32.xlu0 %v504, 32
      %v900 = vpop.permute.xlu0 %899
      %901 = vrot.lane.b32.xlu0 %v505, 32
      %v902 = vpop.permute.xlu0 %901
      %903 = vrot.lane.b32.xlu0 %v506, 32
      %v904 = vpop.permute.xlu0 %903
      %905 = vrot.lane.b32.xlu0 %v507, 32
      %v906 = vpop.permute.xlu0 %905
      %907 = vrot.lane.b32.xlu0 %v508, 32
      %v908 = vpop.permute.xlu0 %907
      %909 = vrot.lane.b32.xlu0 %v509, 32
      %v910 = vpop.permute.xlu0 %909
      %911 = vrot.lane.b32.xlu0 %v510, 32
      %v912 = vpop.permute.xlu0 %911
      %913 = vrot.lane.b32.xlu0 %v511, 32
      %v914 = vpop.permute.xlu0 %913
      %915 = vrot.lane.b32.xlu0 %v512, 32
      %v916 = vpop.permute.xlu0 %915
      %917 = vrot.lane.b32.xlu0 %v513, 32
      %v918 = vpop.permute.xlu0 %917
      %919 = vrot.lane.b32.xlu0 %v514, 32
      %v920 = vpop.permute.xlu0 %919
      %921 = vrot.lane.b32.xlu0 %v515, 32
      %v922 = vpop.permute.xlu0 %921
      %923 = vrot.lane.b32.xlu0 %v516, 32
      %v924 = vpop.permute.xlu0 %923
      %925 = vrot.lane.b32.xlu0 %v517, 32
      %v926 = vpop.permute.xlu0 %925
      %943 = vrot.lane.b32.xlu0 %v863, 64
      %v944 = vpop.permute.xlu0 %943
      %945 = vrot.lane.b32.xlu0 %v864, 64
      %v946 = vpop.permute.xlu0 %945
      %947 = vrot.lane.b32.xlu0 %v865, 64
      %v948 = vpop.permute.xlu0 %947
      %949 = vrot.lane.b32.xlu0 %v866, 64
      %v950 = vpop.permute.xlu0 %949
      %951 = vrot.lane.b32.xlu0 %v867, 64
      %v952 = vpop.permute.xlu0 %951
      %953 = vrot.lane.b32.xlu0 %v868, 64
      %v954 = vpop.permute.xlu0 %953
      %955 = vrot.lane.b32.xlu0 %v869, 64
      %v956 = vpop.permute.xlu0 %955
      %957 = vrot.lane.b32.xlu0 %v870, 64
      %v958 = vpop.permute.xlu0 %957
      %959 = vrot.lane.b32.xlu0 %v871, 64
      %v960 = vpop.permute.xlu0 %959
      %961 = vrot.lane.b32.xlu0 %v872, 64
      %v962 = vpop.permute.xlu0 %961
      %963 = vrot.lane.b32.xlu0 %v873, 64
      %v964 = vpop.permute.xlu0 %963
      %965 = vrot.lane.b32.xlu0 %v874, 64
      %v966 = vpop.permute.xlu0 %965
      %967 = vrot.lane.b32.xlu0 %v875, 64
      %v968 = vpop.permute.xlu0 %967
      %969 = vrot.lane.b32.xlu0 %v876, 64
      %v970 = vpop.permute.xlu0 %969
      %971 = vrot.lane.b32.xlu0 %v877, 64
      %v972 = vpop.permute.xlu0 %971
      %973 = vrot.lane.b32.xlu0 %v878, 64
      %v974 = vpop.permute.xlu0 %973
      %v977 = vsel %vm589, %v454, %v896
      %v980 = vsel %vm589, %v455, %v898
      %v983 = vsel %vm589, %v456, %v900
      %v986 = vsel %vm589, %v457, %v902
      %v989 = vsel %vm589, %v458, %v904
      %v992 = vsel %vm589, %v459, %v906
      %v995 = vsel %vm589, %v460, %v908
      %v998 = vsel %vm589, %v461, %v910
      %v1001 = vsel %vm589, %v462, %v912
      %v1004 = vsel %vm589, %v463, %v914
      %v1007 = vsel %vm589, %v464, %v916
      %v1010 = vsel %vm589, %v465, %v918
      %v1013 = vsel %vm589, %v466, %v920
      %v1016 = vsel %vm589, %v467, %v922
      %v1019 = vsel %vm589, %v468, %v924
      %v1022 = vsel %vm589, %v469, %v926
      %vm1023 = vcmask 523264
      %v1025 = vsel %vm1023, %v977, %v944
      %v1027 = vsel %vm1023, %v980, %v946
      %v1029 = vsel %vm1023, %v983, %v948
      %v1031 = vsel %vm1023, %v986, %v950
      %v1033 = vsel %vm1023, %v989, %v952
      %v1035 = vsel %vm1023, %v992, %v954
      %v1037 = vsel %vm1023, %v995, %v956
      %v1039 = vsel %vm1023, %v998, %v958
      %v1041 = vsel %vm1023, %v1001, %v960
      %v1043 = vsel %vm1023, %v1004, %v962
      %v1045 = vsel %vm1023, %v1007, %v964
      %v1047 = vsel %vm1023, %v1010, %v966
      %v1049 = vsel %vm1023, %v1013, %v968
      %v1051 = vsel %vm1023, %v1016, %v970
      %v1053 = vsel %vm1023, %v1019, %v972
      %v1055 = vsel %vm1023, %v1022, %v974
      %v1056 = vld [vmem:[%s5] sm:$0xf]
      %v1057 = vld [vmem:[%s5 + $0x4] sm:$0xf]
      %v1058 = vld [vmem:[%s5 + $0x8] sm:$0xf]
      %v1059 = vld [vmem:[%s5 + $0xc] sm:$0xf]
      %v1060 = vld [vmem:[%s5 + $0x10] sm:$0xf]
      %v1061 = vld [vmem:[%s5 + $0x14] sm:$0xf]
      %v1062 = vld [vmem:[%s5 + $0x18] sm:$0xf]
      %v1063 = vld [vmem:[%s5 + $0x1c] sm:$0xf]
      %v1064 = vld [vmem:[%s5 + $0x20] sm:$0xf]
      %v1065 = vld [vmem:[%s5 + $0x24] sm:$0xf]
      %v1066 = vld [vmem:[%s5 + $0x28] sm:$0xf]
      %v1067 = vld [vmem:[%s5 + $0x2c] sm:$0xf]
      %v1068 = vld [vmem:[%s6] sm:$0x1]
      %v1070 = vlaneseq
      %v1071 = vshrl.u32 %v1070, 7
      %v1072 = vsub.s32 0, %v1071
      %v1073 = vrot.slane %v1068, %v1072
      %v1087 = vunpack.c.l.b16 %v1056
      %v1088 = vunpack.c.l.b16 %v1057
      %v1089 = vunpack.c.l.b16 %v1058
      %v1090 = vunpack.c.l.b16 %v1059
      %v1091 = vunpack.c.l.b16 %v1060
      %v1092 = vunpack.c.l.b16 %v1061
      %v1093 = vunpack.c.l.b16 %v1062
      %v1094 = vunpack.c.l.b16 %v1063
      %v1095 = vunpack.c.l.b16 %v1064
      %v1096 = vunpack.c.l.b16 %v1065
      %v1097 = vunpack.c.l.b16 %v1066
      %v1098 = vunpack.c.l.b16 %v1067
      %v1099 = vpack.c.b16 %v1088, %v1087
      %v1100 = vpack.c.b16 %v1090, %v1089
      %v1101 = vpack.c.b16 %v1092, %v1091
      %v1102 = vpack.c.b16 %v1094, %v1093
      %v1103 = vpack.c.b16 %v1096, %v1095
      %v1104 = vpack.c.b16 %v1098, %v1097
      %vm1111 = vcmask 785408
      %v1112 = vsel %vm1111, %v1025, 0
      %v1114 = vsel %vm1111, %v1027, 0
      %v1116 = vsel %vm1111, %v1029, 0
      %v1118 = vsel %vm1111, %v1031, 0
      %v1120 = vsel %vm1111, %v1033, 0
      %v1122 = vsel %vm1111, %v1035, 0
      %v1124 = vsel %vm1111, %v1037, 0
      %v1126 = vsel %vm1111, %v1039, 0
      %v1128 = vsel %vm1111, %v1041, 0
      %v1130 = vsel %vm1111, %v1043, 0
      %v1132 = vsel %vm1111, %v1045, 0
      %v1134 = vsel %vm1111, %v1047, 0
      %v1136 = vsel %vm1111, %v1049, 0
      %v1138 = vsel %vm1111, %v1051, 0
      %v1140 = vsel %vm1111, %v1053, 0
      %v1142 = vsel %vm1111, %v1055, 0
      %1144 = vmatprep.subr.bf16.mxu0 0
      %1145 = vmatpush1.bf16.msra.mxu0 0
      %1146 = vmatprep.subr.bf16.mxu0 0
      %1147 = vmatpush1.bf16.msra.mxu0 0
      %1148 = vmatprep.subr.bf16.mxu0 0
      %1149 = vmatpush1.bf16.msra.mxu0 %v1104
      %1150 = vmatprep.subr.bf16.mxu0 0
      %1151 = vmatpush1.bf16.msra.mxu0 %v1103
      %1152 = vmatprep.subr.bf16.mxu0 0
      %1153 = vmatpush1.bf16.msra.mxu0 %v1102
      %1154 = vmatprep.subr.bf16.mxu0 0
      %1155 = vmatpush1.bf16.msra.mxu0 %v1101
      %1156 = vmatprep.subr.bf16.mxu0 0
      %1157 = vmatpush1.bf16.msra.mxu0 %v1100
      %1158 = vmatprep.subr.bf16.mxu0 0
      %1159 = vmatpush1.bf16.msra.mxu0 %v1099
      %1160 = vmatprep.subr.bf16.mxu0 0
      %1161 = vmatpush2.bf16.msra.mxu0 0
      %1162 = vmatprep.subr.bf16.mxu0 0
      %1163 = vmatpush2.bf16.msra.mxu0 0
      %1164 = vmatprep.subr.bf16.mxu0 0
      %1165 = vmatpush2.bf16.msra.mxu0 0
      %1166 = vmatprep.subr.bf16.mxu0 0
      %1167 = vmatpush2.bf16.msra.mxu0 0
      %1168 = vmatprep.subr.bf16.mxu0 0
      %1169 = vmatpush2.bf16.msra.mxu0 0
      %1170 = vmatprep.subr.bf16.mxu0 0
      %1171 = vmatpush2.bf16.msra.mxu0 0
      %1172 = vmatprep.subr.bf16.mxu0 0
      %1173 = vmatpush2.bf16.msra.mxu0 0
      %1174 = vmatprep.subr.bf16.mxu0 0
      %1175 = vmatpush2.bf16.msra.mxu0 0
      %1176 = vmatprep.mubr.bf16.mxu0 0
      %1177 = vmatmul.mubr.bf16.gmra.mxu0 %v1112
      %v1178 = vpop.f32.mrf.mxu0
      %v1179 = vadd.f32 %v1073, %v1178
      %v1180 = vpop.f32.mrf.mxu0
      %v1181 = vpop.f32.mrf.mxu0
      %v1182 = vadd.f32 %v1073, %v1181
      %v1183 = vpop.f32.mrf.mxu0
      %1184 = vmatprep.mubr.bf16.mxu0 0
      %1185 = vmatmul.mubr.bf16.gmra.mxu0 %v1114
      %v1186 = vpop.f32.mrf.mxu0
      %v1187 = vadd.f32 %v1073, %v1186
      %v1188 = vpop.f32.mrf.mxu0
      %v1189 = vpop.f32.mrf.mxu0
      %v1190 = vadd.f32 %v1073, %v1189
      %v1191 = vpop.f32.mrf.mxu0
      %1192 = vmatprep.mubr.bf16.mxu0 0
      %1193 = vmatmul.mubr.bf16.gmra.mxu0 %v1116
      %v1194 = vpop.f32.mrf.mxu0
      %v1195 = vadd.f32 %v1073, %v1194
      %v1196 = vpop.f32.mrf.mxu0
      %v1197 = vpop.f32.mrf.mxu0
      %v1198 = vadd.f32 %v1073, %v1197
      %v1199 = vpop.f32.mrf.mxu0
      %1200 = vmatprep.mubr.bf16.mxu0 0
      %1201 = vmatmul.mubr.bf16.gmra.mxu0 %v1118
      %v1202 = vpop.f32.mrf.mxu0
      %v1203 = vadd.f32 %v1073, %v1202
      %v1204 = vpop.f32.mrf.mxu0
      %v1205 = vpop.f32.mrf.mxu0
      %v1206 = vadd.f32 %v1073, %v1205
      %v1207 = vpop.f32.mrf.mxu0
      %1208 = vmatprep.mubr.bf16.mxu0 0
      %1209 = vmatmul.mubr.bf16.gmra.mxu0 %v1120
      %v1210 = vpop.f32.mrf.mxu0
      %v1211 = vadd.f32 %v1073, %v1210
      %v1212 = vpop.f32.mrf.mxu0
      %v1213 = vpop.f32.mrf.mxu0
      %v1214 = vadd.f32 %v1073, %v1213
      %v1215 = vpop.f32.mrf.mxu0
      %1216 = vmatprep.mubr.bf16.mxu0 0
      %1217 = vmatmul.mubr.bf16.gmra.mxu0 %v1122
      %v1218 = vpop.f32.mrf.mxu0
      %v1219 = vadd.f32 %v1073, %v1218
      %v1220 = vpop.f32.mrf.mxu0
      %v1221 = vpop.f32.mrf.mxu0
      %v1222 = vadd.f32 %v1073, %v1221
      %v1223 = vpop.f32.mrf.mxu0
      %1224 = vmatprep.mubr.bf16.mxu0 0
      %1225 = vmatmul.mubr.bf16.gmra.mxu0 %v1124
      %v1226 = vpop.f32.mrf.mxu0
      %v1227 = vadd.f32 %v1073, %v1226
      %v1228 = vpop.f32.mrf.mxu0
      %v1229 = vpop.f32.mrf.mxu0
      %v1230 = vadd.f32 %v1073, %v1229
      %v1231 = vpop.f32.mrf.mxu0
      %1232 = vmatprep.mubr.bf16.mxu0 0
      %1233 = vmatmul.mubr.bf16.gmra.mxu0 %v1126
      %v1234 = vpop.f32.mrf.mxu0
      %v1235 = vadd.f32 %v1073, %v1234
      %v1236 = vpop.f32.mrf.mxu0
      %v1237 = vpop.f32.mrf.mxu0
      %v1238 = vadd.f32 %v1073, %v1237
      %v1239 = vpop.f32.mrf.mxu0
      %1240 = vmatprep.mubr.bf16.mxu0 0
      %1241 = vmatmul.mubr.bf16.gmra.mxu0 %v1128
      %v1242 = vpop.f32.mrf.mxu0
      %v1243 = vadd.f32 %v1073, %v1242
      %v1244 = vpop.f32.mrf.mxu0
      %v1245 = vpop.f32.mrf.mxu0
      %v1246 = vadd.f32 %v1073, %v1245
      %v1247 = vpop.f32.mrf.mxu0
      %1248 = vmatprep.mubr.bf16.mxu0 0
      %1249 = vmatmul.mubr.bf16.gmra.mxu0 %v1130
      %v1250 = vpop.f32.mrf.mxu0
      %v1251 = vadd.f32 %v1073, %v1250
      %v1252 = vpop.f32.mrf.mxu0
      %v1253 = vpop.f32.mrf.mxu0
      %v1254 = vadd.f32 %v1073, %v1253
      %v1255 = vpop.f32.mrf.mxu0
      %1256 = vmatprep.mubr.bf16.mxu0 0
      %1257 = vmatmul.mubr.bf16.gmra.mxu0 %v1132
      %v1258 = vpop.f32.mrf.mxu0
      %v1259 = vadd.f32 %v1073, %v1258
      %v1260 = vpop.f32.mrf.mxu0
      %v1261 = vpop.f32.mrf.mxu0
      %v1262 = vadd.f32 %v1073, %v1261
      %v1263 = vpop.f32.mrf.mxu0
      %1264 = vmatprep.mubr.bf16.mxu0 0
      %1265 = vmatmul.mubr.bf16.gmra.mxu0 %v1134
      %v1266 = vpop.f32.mrf.mxu0
      %v1267 = vadd.f32 %v1073, %v1266
      %v1268 = vpop.f32.mrf.mxu0
      %v1269 = vpop.f32.mrf.mxu0
      %v1270 = vadd.f32 %v1073, %v1269
      %v1271 = vpop.f32.mrf.mxu0
      %1272 = vmatprep.mubr.bf16.mxu0 0
      %1273 = vmatmul.mubr.bf16.gmra.mxu0 %v1136
      %v1274 = vpop.f32.mrf.mxu0
      %v1275 = vadd.f32 %v1073, %v1274
      %v1276 = vpop.f32.mrf.mxu0
      %v1277 = vpop.f32.mrf.mxu0
      %v1278 = vadd.f32 %v1073, %v1277
      %v1279 = vpop.f32.mrf.mxu0
      %1280 = vmatprep.mubr.bf16.mxu0 0
      %1281 = vmatmul.mubr.bf16.gmra.mxu0 %v1138
      %v1282 = vpop.f32.mrf.mxu0
      %v1283 = vadd.f32 %v1073, %v1282
      %v1284 = vpop.f32.mrf.mxu0
      %v1285 = vpop.f32.mrf.mxu0
      %v1286 = vadd.f32 %v1073, %v1285
      %v1287 = vpop.f32.mrf.mxu0
      %1288 = vmatprep.mubr.bf16.mxu0 0
      %1289 = vmatmul.mubr.bf16.gmra.mxu0 %v1140
      %v1290 = vpop.f32.mrf.mxu0
      %v1291 = vadd.f32 %v1073, %v1290
      %v1292 = vpop.f32.mrf.mxu0
      %v1293 = vpop.f32.mrf.mxu0
      %v1294 = vadd.f32 %v1073, %v1293
      %v1295 = vpop.f32.mrf.mxu0
      %1296 = vmatprep.mubr.bf16.mxu0 0
      %1297 = vmatmul.mubr.bf16.gmra.mxu0 %v1142
      %v1298 = vpop.f32.mrf.mxu0
      %v1299 = vadd.f32 %v1073, %v1298
      %v1300 = vpop.f32.mrf.mxu0
      %v1301 = vpop.f32.mrf.mxu0
      %v1302 = vadd.f32 %v1073, %v1301
      %v1303 = vpop.f32.mrf.mxu0
      %1304 = vdwg.mxu0
      %v1305 = vmax.f32 %v1179, 0.0
      %v1306 = vmax.f32 %v1182, 0.0
      %v1307 = vmax.f32 %v1187, 0.0
      %v1308 = vmax.f32 %v1190, 0.0
      %v1309 = vmax.f32 %v1195, 0.0
      %v1310 = vmax.f32 %v1198, 0.0
      %v1311 = vmax.f32 %v1203, 0.0
      %v1312 = vmax.f32 %v1206, 0.0
      %v1313 = vmax.f32 %v1211, 0.0
      %v1314 = vmax.f32 %v1214, 0.0
      %v1315 = vmax.f32 %v1219, 0.0
      %v1316 = vmax.f32 %v1222, 0.0
      %v1317 = vmax.f32 %v1227, 0.0
      %v1318 = vmax.f32 %v1230, 0.0
      %v1319 = vmax.f32 %v1235, 0.0
      %v1320 = vmax.f32 %v1238, 0.0
      %v1321 = vmax.f32 %v1243, 0.0
      %v1322 = vmax.f32 %v1246, 0.0
      %v1323 = vmax.f32 %v1251, 0.0
      %v1324 = vmax.f32 %v1254, 0.0
      %v1325 = vmax.f32 %v1259, 0.0
      %v1326 = vmax.f32 %v1262, 0.0
      %v1327 = vmax.f32 %v1267, 0.0
      %v1328 = vmax.f32 %v1270, 0.0
      %v1329 = vmax.f32 %v1275, 0.0
      %v1330 = vmax.f32 %v1278, 0.0
      %v1331 = vmax.f32 %v1283, 0.0
      %v1332 = vmax.f32 %v1286, 0.0
      %v1333 = vmax.f32 %v1291, 0.0
      %v1334 = vmax.f32 %v1294, 0.0
      %v1335 = vmax.f32 %v1299, 0.0
      %v1336 = vmax.f32 %v1302, 0.0
      %v1337 = vpack.c.bf16 %v1306, %v1305
      %v1338 = vpack.c.bf16 %v1308, %v1307
      %v1339 = vpack.c.bf16 %v1310, %v1309
      %v1340 = vpack.c.bf16 %v1312, %v1311
      %v1341 = vpack.c.bf16 %v1314, %v1313
      %v1342 = vpack.c.bf16 %v1316, %v1315
      %v1343 = vpack.c.bf16 %v1318, %v1317
      %v1344 = vpack.c.bf16 %v1320, %v1319
      %v1345 = vpack.c.bf16 %v1322, %v1321
      %v1346 = vpack.c.bf16 %v1324, %v1323
      %v1347 = vpack.c.bf16 %v1326, %v1325
      %v1348 = vpack.c.bf16 %v1328, %v1327
      %v1349 = vpack.c.bf16 %v1330, %v1329
      %v1350 = vpack.c.bf16 %v1332, %v1331
      %v1351 = vpack.c.bf16 %v1334, %v1333
      %v1352 = vpack.c.bf16 %v1336, %v1335
      %v1353 = vld [vmem:[%s7] sm:$0xf]
      %v1354 = vld [vmem:[%s7 + $0x4] sm:$0xf]
      %v1355 = vld [vmem:[%s7 + $0x8] sm:$0xf]
      %v1356 = vld [vmem:[%s7 + $0xc] sm:$0xf]
      %v1357 = vld [vmem:[%s7 + $0x10] sm:$0xf]
      %v1358 = vld [vmem:[%s7 + $0x14] sm:$0xf]
      %v1359 = vld [vmem:[%s7 + $0x18] sm:$0xf]
      %v1360 = vld [vmem:[%s7 + $0x1c] sm:$0xf]
      %v1361 = vld [vmem:[%s8] sm:$0x1]
      %v1363 = vlaneseq
      %v1364 = vshrl.u32 %v1363, 7
      %v1365 = vsub.s32 0, %v1364
      %v1366 = vrot.slane %v1361, %v1365
      %v1376 = vunpack.c.l.b16 %v1353
      %v1377 = vunpack.c.l.b16 %v1354
      %v1378 = vunpack.c.l.b16 %v1355
      %v1379 = vunpack.c.l.b16 %v1356
      %v1380 = vunpack.c.l.b16 %v1357
      %v1381 = vunpack.c.l.b16 %v1358
      %v1382 = vunpack.c.l.b16 %v1359
      %v1383 = vunpack.c.l.b16 %v1360
      %v1384 = vpack.c.b16 %v1377, %v1376
      %v1385 = vpack.c.b16 %v1379, %v1378
      %v1386 = vpack.c.b16 %v1381, %v1380
      %v1387 = vpack.c.b16 %v1383, %v1382
      %v1393 = vsel %vm1023, %v1337, 0
      %v1396 = vsel %vm1023, %v1338, 0
      %v1399 = vsel %vm1023, %v1339, 0
      %v1402 = vsel %vm1023, %v1340, 0
      %v1405 = vsel %vm1023, %v1341, 0
      %v1408 = vsel %vm1023, %v1342, 0
      %v1411 = vsel %vm1023, %v1343, 0
      %v1414 = vsel %vm1023, %v1344, 0
      %v1417 = vsel %vm1023, %v1345, 0
      %v1420 = vsel %vm1023, %v1346, 0
      %v1423 = vsel %vm1023, %v1347, 0
      %v1426 = vsel %vm1023, %v1348, 0
      %v1429 = vsel %vm1023, %v1349, 0
      %v1432 = vsel %vm1023, %v1350, 0
      %v1435 = vsel %vm1023, %v1351, 0
      %v1438 = vsel %vm1023, %v1352, 0
      %1440 = vmatprep.subr.bf16.mxu0 0
      %1441 = vmatpush1.bf16.msra.mxu0 0
      %1442 = vmatprep.subr.bf16.mxu0 0
      %1443 = vmatpush1.bf16.msra.mxu0 0
      %1444 = vmatprep.subr.bf16.mxu0 0
      %1445 = vmatpush1.bf16.msra.mxu0 0
      %1446 = vmatprep.subr.bf16.mxu0 0
      %1447 = vmatpush1.bf16.msra.mxu0 0
      %1448 = vmatprep.subr.bf16.mxu0 0
      %1449 = vmatpush1.bf16.msra.mxu0 %v1387
      %1450 = vmatprep.subr.bf16.mxu0 0
      %1451 = vmatpush1.bf16.msra.mxu0 %v1386
      %1452 = vmatprep.subr.bf16.mxu0 0
      %1453 = vmatpush1.bf16.msra.mxu0 %v1385
      %1454 = vmatprep.subr.bf16.mxu0 0
      %1455 = vmatpush1.bf16.msra.mxu0 %v1384
      %1456 = vmatprep.subr.bf16.mxu0 0
      %1457 = vmatpush2.bf16.msra.mxu0 0
      %1458 = vmatprep.subr.bf16.mxu0 0
      %1459 = vmatpush2.bf16.msra.mxu0 0
      %1460 = vmatprep.subr.bf16.mxu0 0
      %1461 = vmatpush2.bf16.msra.mxu0 0
      %1462 = vmatprep.subr.bf16.mxu0 0
      %1463 = vmatpush2.bf16.msra.mxu0 0
      %1464 = vmatprep.subr.bf16.mxu0 0
      %1465 = vmatpush2.bf16.msra.mxu0 0
      %1466 = vmatprep.subr.bf16.mxu0 0
      %1467 = vmatpush2.bf16.msra.mxu0 0
      %1468 = vmatprep.subr.bf16.mxu0 0
      %1469 = vmatpush2.bf16.msra.mxu0 0
      %1470 = vmatprep.subr.bf16.mxu0 0
      %1471 = vmatpush2.bf16.msra.mxu0 0
      %1472 = vmatprep.mubr.bf16.mxu0 0
      %1473 = vmatmul.mubr.bf16.gmra.mxu0 %v1393
      %v1474 = vpop.f32.mrf.mxu0
      %v1475 = vadd.f32 %v1366, %v1474
      %v1476 = vpop.f32.mrf.mxu0
      %v1477 = vpop.f32.mrf.mxu0
      %v1478 = vadd.f32 %v1366, %v1477
      %v1479 = vpop.f32.mrf.mxu0
      %1480 = vmatprep.mubr.bf16.mxu0 0
      %1481 = vmatmul.mubr.bf16.gmra.mxu0 %v1396
      %v1482 = vpop.f32.mrf.mxu0
      %v1483 = vadd.f32 %v1366, %v1482
      %v1484 = vpop.f32.mrf.mxu0
      %v1485 = vpop.f32.mrf.mxu0
      %v1486 = vadd.f32 %v1366, %v1485
      %v1487 = vpop.f32.mrf.mxu0
      %1488 = vmatprep.mubr.bf16.mxu0 0
      %1489 = vmatmul.mubr.bf16.gmra.mxu0 %v1399
      %v1490 = vpop.f32.mrf.mxu0
      %v1491 = vadd.f32 %v1366, %v1490
      %v1492 = vpop.f32.mrf.mxu0
      %v1493 = vpop.f32.mrf.mxu0
      %v1494 = vadd.f32 %v1366, %v1493
      %v1495 = vpop.f32.mrf.mxu0
      %1496 = vmatprep.mubr.bf16.mxu0 0
      %1497 = vmatmul.mubr.bf16.gmra.mxu0 %v1402
      %v1498 = vpop.f32.mrf.mxu0
      %v1499 = vadd.f32 %v1366, %v1498
      %v1500 = vpop.f32.mrf.mxu0
      %v1501 = vpop.f32.mrf.mxu0
      %v1502 = vadd.f32 %v1366, %v1501
      %v1503 = vpop.f32.mrf.mxu0
      %1504 = vmatprep.mubr.bf16.mxu0 0
      %1505 = vmatmul.mubr.bf16.gmra.mxu0 %v1405
      %v1506 = vpop.f32.mrf.mxu0
      %v1507 = vadd.f32 %v1366, %v1506
      %v1508 = vpop.f32.mrf.mxu0
      %v1509 = vpop.f32.mrf.mxu0
      %v1510 = vadd.f32 %v1366, %v1509
      %v1511 = vpop.f32.mrf.mxu0
      %1512 = vmatprep.mubr.bf16.mxu0 0
      %1513 = vmatmul.mubr.bf16.gmra.mxu0 %v1408
      %v1514 = vpop.f32.mrf.mxu0
      %v1515 = vadd.f32 %v1366, %v1514
      %v1516 = vpop.f32.mrf.mxu0
      %v1517 = vpop.f32.mrf.mxu0
      %v1518 = vadd.f32 %v1366, %v1517
      %v1519 = vpop.f32.mrf.mxu0
      %1520 = vmatprep.mubr.bf16.mxu0 0
      %1521 = vmatmul.mubr.bf16.gmra.mxu0 %v1411
      %v1522 = vpop.f32.mrf.mxu0
      %v1523 = vadd.f32 %v1366, %v1522
      %v1524 = vpop.f32.mrf.mxu0
      %v1525 = vpop.f32.mrf.mxu0
      %v1526 = vadd.f32 %v1366, %v1525
      %v1527 = vpop.f32.mrf.mxu0
      %1528 = vmatprep.mubr.bf16.mxu0 0
      %1529 = vmatmul.mubr.bf16.gmra.mxu0 %v1414
      %v1530 = vpop.f32.mrf.mxu0
      %v1531 = vadd.f32 %v1366, %v1530
      %v1532 = vpop.f32.mrf.mxu0
      %v1533 = vpop.f32.mrf.mxu0
      %v1534 = vadd.f32 %v1366, %v1533
      %v1535 = vpop.f32.mrf.mxu0
      %1536 = vmatprep.mubr.bf16.mxu0 0
      %1537 = vmatmul.mubr.bf16.gmra.mxu0 %v1417
      %v1538 = vpop.f32.mrf.mxu0
      %v1539 = vadd.f32 %v1366, %v1538
      %v1540 = vpop.f32.mrf.mxu0
      %v1541 = vpop.f32.mrf.mxu0
      %v1542 = vadd.f32 %v1366, %v1541
      %v1543 = vpop.f32.mrf.mxu0
      %1544 = vmatprep.mubr.bf16.mxu0 0
      %1545 = vmatmul.mubr.bf16.gmra.mxu0 %v1420
      %v1546 = vpop.f32.mrf.mxu0
      %v1547 = vadd.f32 %v1366, %v1546
      %v1548 = vpop.f32.mrf.mxu0
      %v1549 = vpop.f32.mrf.mxu0
      %v1550 = vadd.f32 %v1366, %v1549
      %v1551 = vpop.f32.mrf.mxu0
      %1552 = vmatprep.mubr.bf16.mxu0 0
      %1553 = vmatmul.mubr.bf16.gmra.mxu0 %v1423
      %v1554 = vpop.f32.mrf.mxu0
      %v1555 = vadd.f32 %v1366, %v1554
      %v1556 = vpop.f32.mrf.mxu0
      %v1557 = vpop.f32.mrf.mxu0
      %v1558 = vadd.f32 %v1366, %v1557
      %v1559 = vpop.f32.mrf.mxu0
      %1560 = vmatprep.mubr.bf16.mxu0 0
      %1561 = vmatmul.mubr.bf16.gmra.mxu0 %v1426
      %v1562 = vpop.f32.mrf.mxu0
      %v1563 = vadd.f32 %v1366, %v1562
      %v1564 = vpop.f32.mrf.mxu0
      %v1565 = vpop.f32.mrf.mxu0
      %v1566 = vadd.f32 %v1366, %v1565
      %v1567 = vpop.f32.mrf.mxu0
      %1568 = vmatprep.mubr.bf16.mxu0 0
      %1569 = vmatmul.mubr.bf16.gmra.mxu0 %v1429
      %v1570 = vpop.f32.mrf.mxu0
      %v1571 = vadd.f32 %v1366, %v1570
      %v1572 = vpop.f32.mrf.mxu0
      %v1573 = vpop.f32.mrf.mxu0
      %v1574 = vadd.f32 %v1366, %v1573
      %v1575 = vpop.f32.mrf.mxu0
      %1576 = vmatprep.mubr.bf16.mxu0 0
      %1577 = vmatmul.mubr.bf16.gmra.mxu0 %v1432
      %v1578 = vpop.f32.mrf.mxu0
      %v1579 = vadd.f32 %v1366, %v1578
      %v1580 = vpop.f32.mrf.mxu0
      %v1581 = vpop.f32.mrf.mxu0
      %v1582 = vadd.f32 %v1366, %v1581
      %v1583 = vpop.f32.mrf.mxu0
      %1584 = vmatprep.mubr.bf16.mxu0 0
      %1585 = vmatmul.mubr.bf16.gmra.mxu0 %v1435
      %v1586 = vpop.f32.mrf.mxu0
      %v1587 = vadd.f32 %v1366, %v1586
      %v1588 = vpop.f32.mrf.mxu0
      %v1589 = vpop.f32.mrf.mxu0
      %v1590 = vadd.f32 %v1366, %v1589
      %v1591 = vpop.f32.mrf.mxu0
      %1592 = vmatprep.mubr.bf16.mxu0 0
      %1593 = vmatmul.mubr.bf16.gmra.mxu0 %v1438
      %v1594 = vpop.f32.mrf.mxu0
      %v1595 = vadd.f32 %v1366, %v1594
      %v1596 = vpop.f32.mrf.mxu0
      %v1597 = vpop.f32.mrf.mxu0
      %v1598 = vadd.f32 %v1366, %v1597
      %v1599 = vpop.f32.mrf.mxu0
      %1600 = vdwg.mxu0
      %v1601 = vmax.f32 %v1475, 0.0
      %v1602 = vmax.f32 %v1478, 0.0
      %v1603 = vmax.f32 %v1483, 0.0
      %v1604 = vmax.f32 %v1486, 0.0
      %v1605 = vmax.f32 %v1491, 0.0
      %v1606 = vmax.f32 %v1494, 0.0
      %v1607 = vmax.f32 %v1499, 0.0
      %v1608 = vmax.f32 %v1502, 0.0
      %v1609 = vmax.f32 %v1507, 0.0
      %v1610 = vmax.f32 %v1510, 0.0
      %v1611 = vmax.f32 %v1515, 0.0
      %v1612 = vmax.f32 %v1518, 0.0
      %v1613 = vmax.f32 %v1523, 0.0
      %v1614 = vmax.f32 %v1526, 0.0
      %v1615 = vmax.f32 %v1531, 0.0
      %v1616 = vmax.f32 %v1534, 0.0
      %v1617 = vmax.f32 %v1539, 0.0
      %v1618 = vmax.f32 %v1542, 0.0
      %v1619 = vmax.f32 %v1547, 0.0
      %v1620 = vmax.f32 %v1550, 0.0
      %v1621 = vmax.f32 %v1555, 0.0
      %v1622 = vmax.f32 %v1558, 0.0
      %v1623 = vmax.f32 %v1563, 0.0
      %v1624 = vmax.f32 %v1566, 0.0
      %v1625 = vmax.f32 %v1571, 0.0
      %v1626 = vmax.f32 %v1574, 0.0
      %v1627 = vmax.f32 %v1579, 0.0
      %v1628 = vmax.f32 %v1582, 0.0
      %v1629 = vmax.f32 %v1587, 0.0
      %v1630 = vmax.f32 %v1590, 0.0
      %v1631 = vmax.f32 %v1595, 0.0
      %v1632 = vmax.f32 %v1598, 0.0
      %1633 = vst.msk [vmem:[%s419] sm:$0xff] %vm589, %v1601
      %1634 = vst.msk [vmem:[%s419 + $0x8] sm:$0xff] %vm589, %v1602
      %1635 = vst.msk [vmem:[%s419 + $0x10] sm:$0xff] %vm589, %v1603
      %1636 = vst.msk [vmem:[%s419 + $0x18] sm:$0xff] %vm589, %v1604
      %1637 = vst.msk [vmem:[%s419 + $0x20] sm:$0xff] %vm589, %v1605
      %1638 = vst.msk [vmem:[%s419 + $0x28] sm:$0xff] %vm589, %v1606
      %1639 = vst.msk [vmem:[%s419 + $0x30] sm:$0xff] %vm589, %v1607
      %1640 = vst.msk [vmem:[%s419 + $0x38] sm:$0xff] %vm589, %v1608
      %1641 = vst.msk [vmem:[%s419 + $0x40] sm:$0xff] %vm589, %v1609
      %1642 = vst.msk [vmem:[%s419 + $0x48] sm:$0xff] %vm589, %v1610
      %1643 = vst.msk [vmem:[%s419 + $0x50] sm:$0xff] %vm589, %v1611
      %1644 = vst.msk [vmem:[%s419 + $0x58] sm:$0xff] %vm589, %v1612
      %1645 = vst.msk [vmem:[%s419 + $0x60] sm:$0xff] %vm589, %v1613
      %1646 = vst.msk [vmem:[%s419 + $0x68] sm:$0xff] %vm589, %v1614
      %1647 = vst.msk [vmem:[%s419 + $0x70] sm:$0xff] %vm589, %v1615
      %1648 = vst.msk [vmem:[%s419 + $0x78] sm:$0xff] %vm589, %v1616
      %1649 = vst.msk [vmem:[%s419 + $0x80] sm:$0xff] %vm589, %v1617
      %1650 = vst.msk [vmem:[%s419 + $0x88] sm:$0xff] %vm589, %v1618
      %1651 = vst.msk [vmem:[%s419 + $0x90] sm:$0xff] %vm589, %v1619
      %1652 = vst.msk [vmem:[%s419 + $0x98] sm:$0xff] %vm589, %v1620
      %1653 = vst.msk [vmem:[%s419 + $0xa0] sm:$0xff] %vm589, %v1621
      %1654 = vst.msk [vmem:[%s419 + $0xa8] sm:$0xff] %vm589, %v1622
      %1655 = vst.msk [vmem:[%s419 + $0xb0] sm:$0xff] %vm589, %v1623
      %1656 = vst.msk [vmem:[%s419 + $0xb8] sm:$0xff] %vm589, %v1624
      %1657 = vst.msk [vmem:[%s419 + $0xc0] sm:$0xff] %vm589, %v1625
      %1658 = vst.msk [vmem:[%s419 + $0xc8] sm:$0xff] %vm589, %v1626
      %1659 = vst.msk [vmem:[%s419 + $0xd0] sm:$0xff] %vm589, %v1627
      %1660 = vst.msk [vmem:[%s419 + $0xd8] sm:$0xff] %vm589, %v1628
      %1661 = vst.msk [vmem:[%s419 + $0xe0] sm:$0xff] %vm589, %v1629
      %1662 = vst.msk [vmem:[%s419 + $0xe8] sm:$0xff] %vm589, %v1630
      %1663 = vst.msk [vmem:[%s419 + $0xf0] sm:$0xff] %vm589, %v1631
      %1664 = vst.msk [vmem:[%s419 + $0xf8] sm:$0xff] %vm589, %v1632
      %s1665 = smul.u32 32, %s22
      %p1666 = scmp.lt.s32.totalorder %s1665, 63
      %s1667 = scalar_select %p1666, %s1665, 63
      %s1668 = smul.addr %s1667, 8
      %s1669 = scalar_lea.vmem %s9, %s1668
      %s1670 = smul.u32 32, %s22
      %p1671 = scmp.lt.s32.totalorder %s1670, 63
      %s1672 = scalar_select %p1671, %s1670, 63
      %s1673 = smul.addr %s1672, 8
      %s1674 = scalar_lea.vmem %s10, %s1673
      // Predicated region
      $region57: #{mhea_forward.1} parent=55 // pred_check
        %p1675 = pneg %p244
      $region58: #{mhea_forward.1} parent=55 // pred_check_branch
        %1677 = sbr.rel (%p1675) target = $region60
      $region59: #{mhea_forward.1} parent=55 // pred_region
        %s1678 = smul.u32 32, %s22
      $region60: #{mhea_forward.1} parent=55 // pred_fallthru
        _
      // Predicated region
      $region61: #{mhea_forward.1} parent=55 // pred_check
        %p1679 = pneg %p270
      $region62: #{mhea_forward.1} parent=55 // pred_check_branch
        %1681 = sbr.rel (%p1679) target = $region64
      $region63: #{mhea_forward.1} parent=55 // pred_region
        %s1682 = smul.u32 32, %s22
      $region64: #{mhea_forward.1} parent=55 // pred_fallthru
        _
    $region56: #{mhea_forward.1} parent=5 // pred_fallthru
      _
    %p1683 = scmp.le.s32.totalorder 2, %s17
    // Predicated region
    $region65: #{mhea_forward.1} parent=5 // pred_check
      %p1684 = pneg %p1683
    $region66: #{mhea_forward.1} parent=5 // pred_check_branch
      %1686 = sbr.rel (%p1684) target = $region68
    $region67: #{mhea_forward.1} parent=5 // pred_region
      %s1687 = ssub.s32 %s17, 2
      // Predicated region
      $region69: #{mhea_forward.1} parent=67 // pred_check
        %p1688 = pneg %p250
      $region70: #{mhea_forward.1} parent=67 // pred_check_branch
        %1690 = sbr.rel (%p1688) target = $region72
      $region71: #{mhea_forward.1} parent=67 // pred_region
        %s1691 = smul.u32 32, %s23
        %p1692 = scmp.lt.s32.totalorder %s1691, 63
        %s1693 = scalar_select %p1692, %s1691, 63
        %s1694 = smul.addr %s1693, 8
        %s1695 = scalar_lea.vmem %s9, %s1694
      $region72: #{mhea_forward.1} parent=67 // pred_fallthru
        _
      // Predicated region
      $region73: #{mhea_forward.1} parent=67 // pred_check
        %p1696 = pneg %p276
      $region74: #{mhea_forward.1} parent=67 // pred_check_branch
        %1698 = sbr.rel (%p1696) target = $region76
      $region75: #{mhea_forward.1} parent=67 // pred_region
        %s1699 = smul.u32 32, %s23
        %p1700 = scmp.lt.s32.totalorder %s1699, 63
        %s1701 = scalar_select %p1700, %s1699, 63
        %s1702 = smul.addr %s1701, 8
        %s1703 = scalar_lea.vmem %s10, %s1702
      $region76: #{mhea_forward.1} parent=67 // pred_fallthru
        _
    $region68: #{mhea_forward.1} parent=5 // pred_fallthru
      _
  $region6: #{mhea_forward.1} parent=0 // loop_footer
    %s21 = sadd.s32 1, %s17
  $region7: #{mhea_forward.1} parent=0 // loop_footer_branch
    %16 = sbr.rel target = $region3
  $region8: #{mhea_forward.1} parent=0 // loop_exit
    _

</llo_original>
